<compile_context>
chip_gen: v5e
topology: v5e:2x2
jax: 0.10.0
libtpu: 0.0.40
codegen_flags: <defaults>
</compile_context>

<pallas_src>
import functools
import math

import jax
import jax.numpy as jnp
from jax.experimental import pallas as pl
from jax.experimental.pallas import tpu as pltpu

HIDDEN = 100
LANE = 128
SUBLANE = 8


def _round_up(x, m):
    return ((x + m - 1) // m) * m


def _squarenet_kernel(w1_ref, b1_ref, w2_ref, b2_ref, x_ref, o_ref):
    # x_ref / o_ref: (TR, 128) dense batch block.  Weights: flat SMEM vectors.
    x = x_ref[...]
    acc = jnp.zeros_like(x) + b2_ref[0]
    # Unrolled scalar loop over hidden units: splat-FMA + ReLU + scaled
    # accumulate.  Serial dep on acc keeps per-iteration live ranges short.
    for j in range(HIDDEN):
        h = jnp.maximum(w1_ref[j] * x + b1_ref[j], 0.0)
        acc = acc + h * w2_ref[j]
    o_ref[...] = acc.astype(o_ref.dtype)


@functools.partial(jax.jit, static_argnames=("block_rows",))
def squarenet_forward(x, w1, b1, w2, b2, *, block_rows=64):
    """Fused SquareNet forward.

    x : (B, 1) f32 (same layout the PyTorch module takes)
    w1: (1, HIDDEN)   b1: (1, HIDDEN)   w2: (HIDDEN, 1)   b2: (1, 1)
    Returns (B, 1) f32.
    """
    B = x.shape[0]
    dtype = x.dtype

    block_rows = max(SUBLANE, _round_up(block_rows, SUBLANE))
    rows = max(1, pl.cdiv(B, LANE))
    if rows > SUBLANE:
        # Large batch: big tiles (amortize per-step overhead) but keep the
        # grid at >= 2 steps so both v7x TensorCores get "parallel" work.
        tr = min(block_rows, _round_up(pl.cdiv(rows, 2), SUBLANE))
    else:
        tr = SUBLANE
    rows_pad = _round_up(rows, tr)
    b_pad = rows_pad * LANE

    # Batch onto sublanes AND lanes: dense (rows_pad, 128) layout.
    x_dense = jnp.zeros((b_pad,), dtype).at[:B].set(x[:, 0]).reshape(rows_pad, LANE)

    # Flat scalar parameter vectors for SMEM (tiny; fused under jit).
    w1_v = w1.reshape(HIDDEN).astype(dtype)
    b1_v = b1.reshape(HIDDEN).astype(dtype)
    w2_v = w2.reshape(HIDDEN).astype(dtype)
    b2_v = b2.reshape(1).astype(dtype)

    grid = (rows_pad // tr,)
    smem = pl.BlockSpec(memory_space=pltpu.MemorySpace.SMEM)
    y = pl.pallas_call(
        _squarenet_kernel,
        out_shape=jax.ShapeDtypeStruct((rows_pad, LANE), dtype),
        grid=grid,
        in_specs=[smem, smem, smem, smem,
                  pl.BlockSpec((tr, LANE), lambda i: (i, 0))],
        out_specs=pl.BlockSpec((tr, LANE), lambda i: (i, 0)),
        compiler_params=pltpu.CompilerParams(
            dimension_semantics=("parallel",)),
    )(w1_v, b1_v, w2_v, b2_v, x_dense)

    return y.reshape(-1)[:B].reshape(B, 1)


def init_params(key):
    """Deterministic init mirroring nn.Linear default U(-1/sqrt(fan_in), +)."""
    k1, k2, k3, k4 = jax.random.split(key, 4)
    bound1 = 1.0 / math.sqrt(1.0)       # fan_in of Linear(1, 100)
    bound2 = 1.0 / math.sqrt(HIDDEN)    # fan_in of Linear(100, 1)
    # Stored pre-transposed as (in, out) for the reference math.
    w1 = jax.random.uniform(k1, (1, HIDDEN), jnp.float32, -bound1, bound1)
    b1 = jax.random.uniform(k2, (1, HIDDEN), jnp.float32, -bound1, bound1)
    w2 = jax.random.uniform(k3, (HIDDEN, 1), jnp.float32, -bound2, bound2)
    b2 = jax.random.uniform(k4, (1, 1), jnp.float32, -bound2, bound2)
    return w1, b1, w2, b2


def _reference(x, w1, b1, w2, b2):
    return jnp.maximum(x @ w1 + b1, 0.0) @ w2 + b2


if __name__ == "__main__":
    key = jax.random.PRNGKey(0)
    kx, kp = jax.random.split(key)
    w1, b1, w2, b2 = init_params(kp)

    # Small batch of scalar inputs, consistent with Linear(1, ...).
    B = 8
    x = jax.random.uniform(kx, (B, 1), jnp.float32, 0.0, 10.0)
    out = jax.block_until_ready(squarenet_forward(x, w1, b1, w2, b2))
    ref = _reference(x, w1, b1, w2, b2)
    assert out.shape == (B, 1)
    assert jnp.allclose(out, ref, atol=1e-4, rtol=1e-5)

    # Also exercise the multi-step (tiled, padded) batch grid path: grid=(3,).
    B2 = 3000
    x2 = jax.random.uniform(kx, (B2, 1), jnp.float32, 0.0, 10.0)
    out2 = jax.block_until_ready(
        squarenet_forward(x2, w1, b1, w2, b2, block_rows=8))
    ref2 = _reference(x2, w1, b1, w2, b2)
    assert out2.shape == (B2, 1)
    assert jnp.allclose(out2, ref2, atol=1e-4, rtol=1e-5)

    print("KERNEL_OK")
</pallas_src>

<mosaic_0001>
module attributes {stable_mosaic.version = 11 : i64} {
  func.func @_squarenet_kernel(%arg0: i32, %arg1: memref<100xf32, #tpu.memory_space<smem>>, %arg2: memref<100xf32, #tpu.memory_space<smem>>, %arg3: memref<100xf32, #tpu.memory_space<smem>>, %arg4: memref<1xf32, #tpu.memory_space<smem>>, %arg5: memref<8x128xf32, #tpu.memory_space<vmem>>, %arg6: memref<8x128xf32, #tpu.memory_space<vmem>>) attributes {dimension_semantics = [#tpu.dimension_semantics<parallel>], iteration_bounds = array<i64: 1>, scalar_prefetch = 0 : i64, scratch_operands = 0 : i64, tpu.core_type = #tpu.core_type<tc>, window_params = [{transform_indices = @transform_0, window_bounds = array<i64: 100>}, {transform_indices = @transform_1, window_bounds = array<i64: 100>}, {transform_indices = @transform_2, window_bounds = array<i64: 100>}, {transform_indices = @transform_3, window_bounds = array<i64: 1>}, {transform_indices = @transform_4, window_bounds = array<i64: 8, 128>}, {transform_indices = @transform_5, window_bounds = array<i64: 8, 128>}]} {
    %c0 = arith.constant 0 : index
    %c0_0 = arith.constant 0 : index
    %0 = vector.load %arg5[%c0, %c0_0] : memref<8x128xf32, #tpu.memory_space<vmem>>, vector<8x128xf32>
    %cst = arith.constant 0.000000e+00 : f32
    %1 = vector.broadcast %cst : f32 to vector<8x128xf32>
    %c0_1 = arith.constant 0 : index
    %2 = memref.load %arg4[%c0_1] : memref<1xf32, #tpu.memory_space<smem>>
    %3 = vector.broadcast %2 : f32 to vector<8x128xf32>
    %4 = arith.addf %1, %3 : vector<8x128xf32>
    %c0_2 = arith.constant 0 : index
    %5 = memref.load %arg1[%c0_2] : memref<100xf32, #tpu.memory_space<smem>>
    %6 = vector.broadcast %5 : f32 to vector<8x128xf32>
    %7 = arith.mulf %6, %0 : vector<8x128xf32>
    %c0_3 = arith.constant 0 : index
    %8 = memref.load %arg2[%c0_3] : memref<100xf32, #tpu.memory_space<smem>>
    %9 = vector.broadcast %8 : f32 to vector<8x128xf32>
    %10 = arith.addf %7, %9 : vector<8x128xf32>
    %cst_4 = arith.constant 0.000000e+00 : f32
    %11 = vector.broadcast %cst_4 : f32 to vector<8x128xf32>
    %12 = arith.maximumf %10, %11 : vector<8x128xf32>
    %c0_5 = arith.constant 0 : index
    %13 = memref.load %arg3[%c0_5] : memref<100xf32, #tpu.memory_space<smem>>
    %14 = vector.broadcast %13 : f32 to vector<8x128xf32>
    %15 = arith.mulf %12, %14 : vector<8x128xf32>
    %16 = arith.addf %4, %15 : vector<8x128xf32>
    %c1 = arith.constant 1 : index
    %17 = memref.load %arg1[%c1] : memref<100xf32, #tpu.memory_space<smem>>
    %18 = vector.broadcast %17 : f32 to vector<8x128xf32>
    %19 = arith.mulf %18, %0 : vector<8x128xf32>
    %c1_6 = arith.constant 1 : index
    %20 = memref.load %arg2[%c1_6] : memref<100xf32, #tpu.memory_space<smem>>
    %21 = vector.broadcast %20 : f32 to vector<8x128xf32>
    %22 = arith.addf %19, %21 : vector<8x128xf32>
    %cst_7 = arith.constant 0.000000e+00 : f32
    %23 = vector.broadcast %cst_7 : f32 to vector<8x128xf32>
    %24 = arith.maximumf %22, %23 : vector<8x128xf32>
    %c1_8 = arith.constant 1 : index
    %25 = memref.load %arg3[%c1_8] : memref<100xf32, #tpu.memory_space<smem>>
    %26 = vector.broadcast %25 : f32 to vector<8x128xf32>
    %27 = arith.mulf %24, %26 : vector<8x128xf32>
    %28 = arith.addf %16, %27 : vector<8x128xf32>
    %c2 = arith.constant 2 : index
    %29 = memref.load %arg1[%c2] : memref<100xf32, #tpu.memory_space<smem>>
    %30 = vector.broadcast %29 : f32 to vector<8x128xf32>
    %31 = arith.mulf %30, %0 : vector<8x128xf32>
    %c2_9 = arith.constant 2 : index
    %32 = memref.load %arg2[%c2_9] : memref<100xf32, #tpu.memory_space<smem>>
    %33 = vector.broadcast %32 : f32 to vector<8x128xf32>
    %34 = arith.addf %31, %33 : vector<8x128xf32>
    %cst_10 = arith.constant 0.000000e+00 : f32
    %35 = vector.broadcast %cst_10 : f32 to vector<8x128xf32>
    %36 = arith.maximumf %34, %35 : vector<8x128xf32>
    %c2_11 = arith.constant 2 : index
    %37 = memref.load %arg3[%c2_11] : memref<100xf32, #tpu.memory_space<smem>>
    %38 = vector.broadcast %37 : f32 to vector<8x128xf32>
    %39 = arith.mulf %36, %38 : vector<8x128xf32>
    %40 = arith.addf %28, %39 : vector<8x128xf32>
    %c3 = arith.constant 3 : index
    %41 = memref.load %arg1[%c3] : memref<100xf32, #tpu.memory_space<smem>>
    %42 = vector.broadcast %41 : f32 to vector<8x128xf32>
    %43 = arith.mulf %42, %0 : vector<8x128xf32>
    %c3_12 = arith.constant 3 : index
    %44 = memref.load %arg2[%c3_12] : memref<100xf32, #tpu.memory_space<smem>>
    %45 = vector.broadcast %44 : f32 to vector<8x128xf32>
    %46 = arith.addf %43, %45 : vector<8x128xf32>
    %cst_13 = arith.constant 0.000000e+00 : f32
    %47 = vector.broadcast %cst_13 : f32 to vector<8x128xf32>
    %48 = arith.maximumf %46, %47 : vector<8x128xf32>
    %c3_14 = arith.constant 3 : index
    %49 = memref.load %arg3[%c3_14] : memref<100xf32, #tpu.memory_space<smem>>
    %50 = vector.broadcast %49 : f32 to vector<8x128xf32>
    %51 = arith.mulf %48, %50 : vector<8x128xf32>
    %52 = arith.addf %40, %51 : vector<8x128xf32>
    %c4 = arith.constant 4 : index
    %53 = memref.load %arg1[%c4] : memref<100xf32, #tpu.memory_space<smem>>
    %54 = vector.broadcast %53 : f32 to vector<8x128xf32>
    %55 = arith.mulf %54, %0 : vector<8x128xf32>
    %c4_15 = arith.constant 4 : index
    %56 = memref.load %arg2[%c4_15] : memref<100xf32, #tpu.memory_space<smem>>
    %57 = vector.broadcast %56 : f32 to vector<8x128xf32>
    %58 = arith.addf %55, %57 : vector<8x128xf32>
    %cst_16 = arith.constant 0.000000e+00 : f32
    %59 = vector.broadcast %cst_16 : f32 to vector<8x128xf32>
    %60 = arith.maximumf %58, %59 : vector<8x128xf32>
    %c4_17 = arith.constant 4 : index
    %61 = memref.load %arg3[%c4_17] : memref<100xf32, #tpu.memory_space<smem>>
    %62 = vector.broadcast %61 : f32 to vector<8x128xf32>
    %63 = arith.mulf %60, %62 : vector<8x128xf32>
    %64 = arith.addf %52, %63 : vector<8x128xf32>
    %c5 = arith.constant 5 : index
    %65 = memref.load %arg1[%c5] : memref<100xf32, #tpu.memory_space<smem>>
    %66 = vector.broadcast %65 : f32 to vector<8x128xf32>
    %67 = arith.mulf %66, %0 : vector<8x128xf32>
    %c5_18 = arith.constant 5 : index
    %68 = memref.load %arg2[%c5_18] : memref<100xf32, #tpu.memory_space<smem>>
    %69 = vector.broadcast %68 : f32 to vector<8x128xf32>
    %70 = arith.addf %67, %69 : vector<8x128xf32>
    %cst_19 = arith.constant 0.000000e+00 : f32
    %71 = vector.broadcast %cst_19 : f32 to vector<8x128xf32>
    %72 = arith.maximumf %70, %71 : vector<8x128xf32>
    %c5_20 = arith.constant 5 : index
    %73 = memref.load %arg3[%c5_20] : memref<100xf32, #tpu.memory_space<smem>>
    %74 = vector.broadcast %73 : f32 to vector<8x128xf32>
    %75 = arith.mulf %72, %74 : vector<8x128xf32>
    %76 = arith.addf %64, %75 : vector<8x128xf32>
    %c6 = arith.constant 6 : index
    %77 = memref.load %arg1[%c6] : memref<100xf32, #tpu.memory_space<smem>>
    %78 = vector.broadcast %77 : f32 to vector<8x128xf32>
    %79 = arith.mulf %78, %0 : vector<8x128xf32>
    %c6_21 = arith.constant 6 : index
    %80 = memref.load %arg2[%c6_21] : memref<100xf32, #tpu.memory_space<smem>>
    %81 = vector.broadcast %80 : f32 to vector<8x128xf32>
    %82 = arith.addf %79, %81 : vector<8x128xf32>
    %cst_22 = arith.constant 0.000000e+00 : f32
    %83 = vector.broadcast %cst_22 : f32 to vector<8x128xf32>
    %84 = arith.maximumf %82, %83 : vector<8x128xf32>
    %c6_23 = arith.constant 6 : index
    %85 = memref.load %arg3[%c6_23] : memref<100xf32, #tpu.memory_space<smem>>
    %86 = vector.broadcast %85 : f32 to vector<8x128xf32>
    %87 = arith.mulf %84, %86 : vector<8x128xf32>
    %88 = arith.addf %76, %87 : vector<8x128xf32>
    %c7 = arith.constant 7 : index
    %89 = memref.load %arg1[%c7] : memref<100xf32, #tpu.memory_space<smem>>
    %90 = vector.broadcast %89 : f32 to vector<8x128xf32>
    %91 = arith.mulf %90, %0 : vector<8x128xf32>
    %c7_24 = arith.constant 7 : index
    %92 = memref.load %arg2[%c7_24] : memref<100xf32, #tpu.memory_space<smem>>
    %93 = vector.broadcast %92 : f32 to vector<8x128xf32>
    %94 = arith.addf %91, %93 : vector<8x128xf32>
    %cst_25 = arith.constant 0.000000e+00 : f32
    %95 = vector.broadcast %cst_25 : f32 to vector<8x128xf32>
    %96 = arith.maximumf %94, %95 : vector<8x128xf32>
    %c7_26 = arith.constant 7 : index
    %97 = memref.load %arg3[%c7_26] : memref<100xf32, #tpu.memory_space<smem>>
    %98 = vector.broadcast %97 : f32 to vector<8x128xf32>
    %99 = arith.mulf %96, %98 : vector<8x128xf32>
    %100 = arith.addf %88, %99 : vector<8x128xf32>
    %c8 = arith.constant 8 : index
    %101 = memref.load %arg1[%c8] : memref<100xf32, #tpu.memory_space<smem>>
    %102 = vector.broadcast %101 : f32 to vector<8x128xf32>
    %103 = arith.mulf %102, %0 : vector<8x128xf32>
    %c8_27 = arith.constant 8 : index
    %104 = memref.load %arg2[%c8_27] : memref<100xf32, #tpu.memory_space<smem>>
    %105 = vector.broadcast %104 : f32 to vector<8x128xf32>
    %106 = arith.addf %103, %105 : vector<8x128xf32>
    %cst_28 = arith.constant 0.000000e+00 : f32
    %107 = vector.broadcast %cst_28 : f32 to vector<8x128xf32>
    %108 = arith.maximumf %106, %107 : vector<8x128xf32>
    %c8_29 = arith.constant 8 : index
    %109 = memref.load %arg3[%c8_29] : memref<100xf32, #tpu.memory_space<smem>>
    %110 = vector.broadcast %109 : f32 to vector<8x128xf32>
    %111 = arith.mulf %108, %110 : vector<8x128xf32>
    %112 = arith.addf %100, %111 : vector<8x128xf32>
    %c9 = arith.constant 9 : index
    %113 = memref.load %arg1[%c9] : memref<100xf32, #tpu.memory_space<smem>>
    %114 = vector.broadcast %113 : f32 to vector<8x128xf32>
    %115 = arith.mulf %114, %0 : vector<8x128xf32>
    %c9_30 = arith.constant 9 : index
    %116 = memref.load %arg2[%c9_30] : memref<100xf32, #tpu.memory_space<smem>>
    %117 = vector.broadcast %116 : f32 to vector<8x128xf32>
    %118 = arith.addf %115, %117 : vector<8x128xf32>
    %cst_31 = arith.constant 0.000000e+00 : f32
    %119 = vector.broadcast %cst_31 : f32 to vector<8x128xf32>
    %120 = arith.maximumf %118, %119 : vector<8x128xf32>
    %c9_32 = arith.constant 9 : index
    %121 = memref.load %arg3[%c9_32] : memref<100xf32, #tpu.memory_space<smem>>
    %122 = vector.broadcast %121 : f32 to vector<8x128xf32>
    %123 = arith.mulf %120, %122 : vector<8x128xf32>
    %124 = arith.addf %112, %123 : vector<8x128xf32>
    %c10 = arith.constant 10 : index
    %125 = memref.load %arg1[%c10] : memref<100xf32, #tpu.memory_space<smem>>
    %126 = vector.broadcast %125 : f32 to vector<8x128xf32>
    %127 = arith.mulf %126, %0 : vector<8x128xf32>
    %c10_33 = arith.constant 10 : index
    %128 = memref.load %arg2[%c10_33] : memref<100xf32, #tpu.memory_space<smem>>
    %129 = vector.broadcast %128 : f32 to vector<8x128xf32>
    %130 = arith.addf %127, %129 : vector<8x128xf32>
    %cst_34 = arith.constant 0.000000e+00 : f32
    %131 = vector.broadcast %cst_34 : f32 to vector<8x128xf32>
    %132 = arith.maximumf %130, %131 : vector<8x128xf32>
    %c10_35 = arith.constant 10 : index
    %133 = memref.load %arg3[%c10_35] : memref<100xf32, #tpu.memory_space<smem>>
    %134 = vector.broadcast %133 : f32 to vector<8x128xf32>
    %135 = arith.mulf %132, %134 : vector<8x128xf32>
    %136 = arith.addf %124, %135 : vector<8x128xf32>
    %c11 = arith.constant 11 : index
    %137 = memref.load %arg1[%c11] : memref<100xf32, #tpu.memory_space<smem>>
    %138 = vector.broadcast %137 : f32 to vector<8x128xf32>
    %139 = arith.mulf %138, %0 : vector<8x128xf32>
    %c11_36 = arith.constant 11 : index
    %140 = memref.load %arg2[%c11_36] : memref<100xf32, #tpu.memory_space<smem>>
    %141 = vector.broadcast %140 : f32 to vector<8x128xf32>
    %142 = arith.addf %139, %141 : vector<8x128xf32>
    %cst_37 = arith.constant 0.000000e+00 : f32
    %143 = vector.broadcast %cst_37 : f32 to vector<8x128xf32>
    %144 = arith.maximumf %142, %143 : vector<8x128xf32>
    %c11_38 = arith.constant 11 : index
    %145 = memref.load %arg3[%c11_38] : memref<100xf32, #tpu.memory_space<smem>>
    %146 = vector.broadcast %145 : f32 to vector<8x128xf32>
    %147 = arith.mulf %144, %146 : vector<8x128xf32>
    %148 = arith.addf %136, %147 : vector<8x128xf32>
    %c12 = arith.constant 12 : index
    %149 = memref.load %arg1[%c12] : memref<100xf32, #tpu.memory_space<smem>>
    %150 = vector.broadcast %149 : f32 to vector<8x128xf32>
    %151 = arith.mulf %150, %0 : vector<8x128xf32>
    %c12_39 = arith.constant 12 : index
    %152 = memref.load %arg2[%c12_39] : memref<100xf32, #tpu.memory_space<smem>>
    %153 = vector.broadcast %152 : f32 to vector<8x128xf32>
    %154 = arith.addf %151, %153 : vector<8x128xf32>
    %cst_40 = arith.constant 0.000000e+00 : f32
    %155 = vector.broadcast %cst_40 : f32 to vector<8x128xf32>
    %156 = arith.maximumf %154, %155 : vector<8x128xf32>
    %c12_41 = arith.constant 12 : index
    %157 = memref.load %arg3[%c12_41] : memref<100xf32, #tpu.memory_space<smem>>
    %158 = vector.broadcast %157 : f32 to vector<8x128xf32>
    %159 = arith.mulf %156, %158 : vector<8x128xf32>
    %160 = arith.addf %148, %159 : vector<8x128xf32>
    %c13 = arith.constant 13 : index
    %161 = memref.load %arg1[%c13] : memref<100xf32, #tpu.memory_space<smem>>
    %162 = vector.broadcast %161 : f32 to vector<8x128xf32>
    %163 = arith.mulf %162, %0 : vector<8x128xf32>
    %c13_42 = arith.constant 13 : index
    %164 = memref.load %arg2[%c13_42] : memref<100xf32, #tpu.memory_space<smem>>
    %165 = vector.broadcast %164 : f32 to vector<8x128xf32>
    %166 = arith.addf %163, %165 : vector<8x128xf32>
    %cst_43 = arith.constant 0.000000e+00 : f32
    %167 = vector.broadcast %cst_43 : f32 to vector<8x128xf32>
    %168 = arith.maximumf %166, %167 : vector<8x128xf32>
    %c13_44 = arith.constant 13 : index
    %169 = memref.load %arg3[%c13_44] : memref<100xf32, #tpu.memory_space<smem>>
    %170 = vector.broadcast %169 : f32 to vector<8x128xf32>
    %171 = arith.mulf %168, %170 : vector<8x128xf32>
    %172 = arith.addf %160, %171 : vector<8x128xf32>
    %c14 = arith.constant 14 : index
    %173 = memref.load %arg1[%c14] : memref<100xf32, #tpu.memory_space<smem>>
    %174 = vector.broadcast %173 : f32 to vector<8x128xf32>
    %175 = arith.mulf %174, %0 : vector<8x128xf32>
    %c14_45 = arith.constant 14 : index
    %176 = memref.load %arg2[%c14_45] : memref<100xf32, #tpu.memory_space<smem>>
    %177 = vector.broadcast %176 : f32 to vector<8x128xf32>
    %178 = arith.addf %175, %177 : vector<8x128xf32>
    %cst_46 = arith.constant 0.000000e+00 : f32
    %179 = vector.broadcast %cst_46 : f32 to vector<8x128xf32>
    %180 = arith.maximumf %178, %179 : vector<8x128xf32>
    %c14_47 = arith.constant 14 : index
    %181 = memref.load %arg3[%c14_47] : memref<100xf32, #tpu.memory_space<smem>>
    %182 = vector.broadcast %181 : f32 to vector<8x128xf32>
    %183 = arith.mulf %180, %182 : vector<8x128xf32>
    %184 = arith.addf %172, %183 : vector<8x128xf32>
    %c15 = arith.constant 15 : index
    %185 = memref.load %arg1[%c15] : memref<100xf32, #tpu.memory_space<smem>>
    %186 = vector.broadcast %185 : f32 to vector<8x128xf32>
    %187 = arith.mulf %186, %0 : vector<8x128xf32>
    %c15_48 = arith.constant 15 : index
    %188 = memref.load %arg2[%c15_48] : memref<100xf32, #tpu.memory_space<smem>>
    %189 = vector.broadcast %188 : f32 to vector<8x128xf32>
    %190 = arith.addf %187, %189 : vector<8x128xf32>
    %cst_49 = arith.constant 0.000000e+00 : f32
    %191 = vector.broadcast %cst_49 : f32 to vector<8x128xf32>
    %192 = arith.maximumf %190, %191 : vector<8x128xf32>
    %c15_50 = arith.constant 15 : index
    %193 = memref.load %arg3[%c15_50] : memref<100xf32, #tpu.memory_space<smem>>
    %194 = vector.broadcast %193 : f32 to vector<8x128xf32>
    %195 = arith.mulf %192, %194 : vector<8x128xf32>
    %196 = arith.addf %184, %195 : vector<8x128xf32>
    %c16 = arith.constant 16 : index
    %197 = memref.load %arg1[%c16] : memref<100xf32, #tpu.memory_space<smem>>
    %198 = vector.broadcast %197 : f32 to vector<8x128xf32>
    %199 = arith.mulf %198, %0 : vector<8x128xf32>
    %c16_51 = arith.constant 16 : index
    %200 = memref.load %arg2[%c16_51] : memref<100xf32, #tpu.memory_space<smem>>
    %201 = vector.broadcast %200 : f32 to vector<8x128xf32>
    %202 = arith.addf %199, %201 : vector<8x128xf32>
    %cst_52 = arith.constant 0.000000e+00 : f32
    %203 = vector.broadcast %cst_52 : f32 to vector<8x128xf32>
    %204 = arith.maximumf %202, %203 : vector<8x128xf32>
    %c16_53 = arith.constant 16 : index
    %205 = memref.load %arg3[%c16_53] : memref<100xf32, #tpu.memory_space<smem>>
    %206 = vector.broadcast %205 : f32 to vector<8x128xf32>
    %207 = arith.mulf %204, %206 : vector<8x128xf32>
    %208 = arith.addf %196, %207 : vector<8x128xf32>
    %c17 = arith.constant 17 : index
    %209 = memref.load %arg1[%c17] : memref<100xf32, #tpu.memory_space<smem>>
    %210 = vector.broadcast %209 : f32 to vector<8x128xf32>
    %211 = arith.mulf %210, %0 : vector<8x128xf32>
    %c17_54 = arith.constant 17 : index
    %212 = memref.load %arg2[%c17_54] : memref<100xf32, #tpu.memory_space<smem>>
    %213 = vector.broadcast %212 : f32 to vector<8x128xf32>
    %214 = arith.addf %211, %213 : vector<8x128xf32>
    %cst_55 = arith.constant 0.000000e+00 : f32
    %215 = vector.broadcast %cst_55 : f32 to vector<8x128xf32>
    %216 = arith.maximumf %214, %215 : vector<8x128xf32>
    %c17_56 = arith.constant 17 : index
    %217 = memref.load %arg3[%c17_56] : memref<100xf32, #tpu.memory_space<smem>>
    %218 = vector.broadcast %217 : f32 to vector<8x128xf32>
    %219 = arith.mulf %216, %218 : vector<8x128xf32>
    %220 = arith.addf %208, %219 : vector<8x128xf32>
    %c18 = arith.constant 18 : index
    %221 = memref.load %arg1[%c18] : memref<100xf32, #tpu.memory_space<smem>>
    %222 = vector.broadcast %221 : f32 to vector<8x128xf32>
    %223 = arith.mulf %222, %0 : vector<8x128xf32>
    %c18_57 = arith.constant 18 : index
    %224 = memref.load %arg2[%c18_57] : memref<100xf32, #tpu.memory_space<smem>>
    %225 = vector.broadcast %224 : f32 to vector<8x128xf32>
    %226 = arith.addf %223, %225 : vector<8x128xf32>
    %cst_58 = arith.constant 0.000000e+00 : f32
    %227 = vector.broadcast %cst_58 : f32 to vector<8x128xf32>
    %228 = arith.maximumf %226, %227 : vector<8x128xf32>
    %c18_59 = arith.constant 18 : index
    %229 = memref.load %arg3[%c18_59] : memref<100xf32, #tpu.memory_space<smem>>
    %230 = vector.broadcast %229 : f32 to vector<8x128xf32>
    %231 = arith.mulf %228, %230 : vector<8x128xf32>
    %232 = arith.addf %220, %231 : vector<8x128xf32>
    %c19 = arith.constant 19 : index
    %233 = memref.load %arg1[%c19] : memref<100xf32, #tpu.memory_space<smem>>
    %234 = vector.broadcast %233 : f32 to vector<8x128xf32>
    %235 = arith.mulf %234, %0 : vector<8x128xf32>
    %c19_60 = arith.constant 19 : index
    %236 = memref.load %arg2[%c19_60] : memref<100xf32, #tpu.memory_space<smem>>
    %237 = vector.broadcast %236 : f32 to vector<8x128xf32>
    %238 = arith.addf %235, %237 : vector<8x128xf32>
    %cst_61 = arith.constant 0.000000e+00 : f32
    %239 = vector.broadcast %cst_61 : f32 to vector<8x128xf32>
    %240 = arith.maximumf %238, %239 : vector<8x128xf32>
    %c19_62 = arith.constant 19 : index
    %241 = memref.load %arg3[%c19_62] : memref<100xf32, #tpu.memory_space<smem>>
    %242 = vector.broadcast %241 : f32 to vector<8x128xf32>
    %243 = arith.mulf %240, %242 : vector<8x128xf32>
    %244 = arith.addf %232, %243 : vector<8x128xf32>
    %c20 = arith.constant 20 : index
    %245 = memref.load %arg1[%c20] : memref<100xf32, #tpu.memory_space<smem>>
    %246 = vector.broadcast %245 : f32 to vector<8x128xf32>
    %247 = arith.mulf %246, %0 : vector<8x128xf32>
    %c20_63 = arith.constant 20 : index
    %248 = memref.load %arg2[%c20_63] : memref<100xf32, #tpu.memory_space<smem>>
    %249 = vector.broadcast %248 : f32 to vector<8x128xf32>
    %250 = arith.addf %247, %249 : vector<8x128xf32>
    %cst_64 = arith.constant 0.000000e+00 : f32
    %251 = vector.broadcast %cst_64 : f32 to vector<8x128xf32>
    %252 = arith.maximumf %250, %251 : vector<8x128xf32>
    %c20_65 = arith.constant 20 : index
    %253 = memref.load %arg3[%c20_65] : memref<100xf32, #tpu.memory_space<smem>>
    %254 = vector.broadcast %253 : f32 to vector<8x128xf32>
    %255 = arith.mulf %252, %254 : vector<8x128xf32>
    %256 = arith.addf %244, %255 : vector<8x128xf32>
    %c21 = arith.constant 21 : index
    %257 = memref.load %arg1[%c21] : memref<100xf32, #tpu.memory_space<smem>>
    %258 = vector.broadcast %257 : f32 to vector<8x128xf32>
    %259 = arith.mulf %258, %0 : vector<8x128xf32>
    %c21_66 = arith.constant 21 : index
    %260 = memref.load %arg2[%c21_66] : memref<100xf32, #tpu.memory_space<smem>>
    %261 = vector.broadcast %260 : f32 to vector<8x128xf32>
    %262 = arith.addf %259, %261 : vector<8x128xf32>
    %cst_67 = arith.constant 0.000000e+00 : f32
    %263 = vector.broadcast %cst_67 : f32 to vector<8x128xf32>
    %264 = arith.maximumf %262, %263 : vector<8x128xf32>
    %c21_68 = arith.constant 21 : index
    %265 = memref.load %arg3[%c21_68] : memref<100xf32, #tpu.memory_space<smem>>
    %266 = vector.broadcast %265 : f32 to vector<8x128xf32>
    %267 = arith.mulf %264, %266 : vector<8x128xf32>
    %268 = arith.addf %256, %267 : vector<8x128xf32>
    %c22 = arith.constant 22 : index
    %269 = memref.load %arg1[%c22] : memref<100xf32, #tpu.memory_space<smem>>
    %270 = vector.broadcast %269 : f32 to vector<8x128xf32>
    %271 = arith.mulf %270, %0 : vector<8x128xf32>
    %c22_69 = arith.constant 22 : index
    %272 = memref.load %arg2[%c22_69] : memref<100xf32, #tpu.memory_space<smem>>
    %273 = vector.broadcast %272 : f32 to vector<8x128xf32>
    %274 = arith.addf %271, %273 : vector<8x128xf32>
    %cst_70 = arith.constant 0.000000e+00 : f32
    %275 = vector.broadcast %cst_70 : f32 to vector<8x128xf32>
    %276 = arith.maximumf %274, %275 : vector<8x128xf32>
    %c22_71 = arith.constant 22 : index
    %277 = memref.load %arg3[%c22_71] : memref<100xf32, #tpu.memory_space<smem>>
    %278 = vector.broadcast %277 : f32 to vector<8x128xf32>
    %279 = arith.mulf %276, %278 : vector<8x128xf32>
    %280 = arith.addf %268, %279 : vector<8x128xf32>
    %c23 = arith.constant 23 : index
    %281 = memref.load %arg1[%c23] : memref<100xf32, #tpu.memory_space<smem>>
    %282 = vector.broadcast %281 : f32 to vector<8x128xf32>
    %283 = arith.mulf %282, %0 : vector<8x128xf32>
    %c23_72 = arith.constant 23 : index
    %284 = memref.load %arg2[%c23_72] : memref<100xf32, #tpu.memory_space<smem>>
    %285 = vector.broadcast %284 : f32 to vector<8x128xf32>
    %286 = arith.addf %283, %285 : vector<8x128xf32>
    %cst_73 = arith.constant 0.000000e+00 : f32
    %287 = vector.broadcast %cst_73 : f32 to vector<8x128xf32>
    %288 = arith.maximumf %286, %287 : vector<8x128xf32>
    %c23_74 = arith.constant 23 : index
    %289 = memref.load %arg3[%c23_74] : memref<100xf32, #tpu.memory_space<smem>>
    %290 = vector.broadcast %289 : f32 to vector<8x128xf32>
    %291 = arith.mulf %288, %290 : vector<8x128xf32>
    %292 = arith.addf %280, %291 : vector<8x128xf32>
    %c24 = arith.constant 24 : index
    %293 = memref.load %arg1[%c24] : memref<100xf32, #tpu.memory_space<smem>>
    %294 = vector.broadcast %293 : f32 to vector<8x128xf32>
    %295 = arith.mulf %294, %0 : vector<8x128xf32>
    %c24_75 = arith.constant 24 : index
    %296 = memref.load %arg2[%c24_75] : memref<100xf32, #tpu.memory_space<smem>>
    %297 = vector.broadcast %296 : f32 to vector<8x128xf32>
    %298 = arith.addf %295, %297 : vector<8x128xf32>
    %cst_76 = arith.constant 0.000000e+00 : f32
    %299 = vector.broadcast %cst_76 : f32 to vector<8x128xf32>
    %300 = arith.maximumf %298, %299 : vector<8x128xf32>
    %c24_77 = arith.constant 24 : index
    %301 = memref.load %arg3[%c24_77] : memref<100xf32, #tpu.memory_space<smem>>
    %302 = vector.broadcast %301 : f32 to vector<8x128xf32>
    %303 = arith.mulf %300, %302 : vector<8x128xf32>
    %304 = arith.addf %292, %303 : vector<8x128xf32>
    %c25 = arith.constant 25 : index
    %305 = memref.load %arg1[%c25] : memref<100xf32, #tpu.memory_space<smem>>
    %306 = vector.broadcast %305 : f32 to vector<8x128xf32>
    %307 = arith.mulf %306, %0 : vector<8x128xf32>
    %c25_78 = arith.constant 25 : index
    %308 = memref.load %arg2[%c25_78] : memref<100xf32, #tpu.memory_space<smem>>
    %309 = vector.broadcast %308 : f32 to vector<8x128xf32>
    %310 = arith.addf %307, %309 : vector<8x128xf32>
    %cst_79 = arith.constant 0.000000e+00 : f32
    %311 = vector.broadcast %cst_79 : f32 to vector<8x128xf32>
    %312 = arith.maximumf %310, %311 : vector<8x128xf32>
    %c25_80 = arith.constant 25 : index
    %313 = memref.load %arg3[%c25_80] : memref<100xf32, #tpu.memory_space<smem>>
    %314 = vector.broadcast %313 : f32 to vector<8x128xf32>
    %315 = arith.mulf %312, %314 : vector<8x128xf32>
    %316 = arith.addf %304, %315 : vector<8x128xf32>
    %c26 = arith.constant 26 : index
    %317 = memref.load %arg1[%c26] : memref<100xf32, #tpu.memory_space<smem>>
    %318 = vector.broadcast %317 : f32 to vector<8x128xf32>
    %319 = arith.mulf %318, %0 : vector<8x128xf32>
    %c26_81 = arith.constant 26 : index
    %320 = memref.load %arg2[%c26_81] : memref<100xf32, #tpu.memory_space<smem>>
    %321 = vector.broadcast %320 : f32 to vector<8x128xf32>
    %322 = arith.addf %319, %321 : vector<8x128xf32>
    %cst_82 = arith.constant 0.000000e+00 : f32
    %323 = vector.broadcast %cst_82 : f32 to vector<8x128xf32>
    %324 = arith.maximumf %322, %323 : vector<8x128xf32>
    %c26_83 = arith.constant 26 : index
    %325 = memref.load %arg3[%c26_83] : memref<100xf32, #tpu.memory_space<smem>>
    %326 = vector.broadcast %325 : f32 to vector<8x128xf32>
    %327 = arith.mulf %324, %326 : vector<8x128xf32>
    %328 = arith.addf %316, %327 : vector<8x128xf32>
    %c27 = arith.constant 27 : index
    %329 = memref.load %arg1[%c27] : memref<100xf32, #tpu.memory_space<smem>>
    %330 = vector.broadcast %329 : f32 to vector<8x128xf32>
    %331 = arith.mulf %330, %0 : vector<8x128xf32>
    %c27_84 = arith.constant 27 : index
    %332 = memref.load %arg2[%c27_84] : memref<100xf32, #tpu.memory_space<smem>>
    %333 = vector.broadcast %332 : f32 to vector<8x128xf32>
    %334 = arith.addf %331, %333 : vector<8x128xf32>
    %cst_85 = arith.constant 0.000000e+00 : f32
    %335 = vector.broadcast %cst_85 : f32 to vector<8x128xf32>
    %336 = arith.maximumf %334, %335 : vector<8x128xf32>
    %c27_86 = arith.constant 27 : index
    %337 = memref.load %arg3[%c27_86] : memref<100xf32, #tpu.memory_space<smem>>
    %338 = vector.broadcast %337 : f32 to vector<8x128xf32>
    %339 = arith.mulf %336, %338 : vector<8x128xf32>
    %340 = arith.addf %328, %339 : vector<8x128xf32>
    %c28 = arith.constant 28 : index
    %341 = memref.load %arg1[%c28] : memref<100xf32, #tpu.memory_space<smem>>
    %342 = vector.broadcast %341 : f32 to vector<8x128xf32>
    %343 = arith.mulf %342, %0 : vector<8x128xf32>
    %c28_87 = arith.constant 28 : index
    %344 = memref.load %arg2[%c28_87] : memref<100xf32, #tpu.memory_space<smem>>
    %345 = vector.broadcast %344 : f32 to vector<8x128xf32>
    %346 = arith.addf %343, %345 : vector<8x128xf32>
    %cst_88 = arith.constant 0.000000e+00 : f32
    %347 = vector.broadcast %cst_88 : f32 to vector<8x128xf32>
    %348 = arith.maximumf %346, %347 : vector<8x128xf32>
    %c28_89 = arith.constant 28 : index
    %349 = memref.load %arg3[%c28_89] : memref<100xf32, #tpu.memory_space<smem>>
    %350 = vector.broadcast %349 : f32 to vector<8x128xf32>
    %351 = arith.mulf %348, %350 : vector<8x128xf32>
    %352 = arith.addf %340, %351 : vector<8x128xf32>
    %c29 = arith.constant 29 : index
    %353 = memref.load %arg1[%c29] : memref<100xf32, #tpu.memory_space<smem>>
    %354 = vector.broadcast %353 : f32 to vector<8x128xf32>
    %355 = arith.mulf %354, %0 : vector<8x128xf32>
    %c29_90 = arith.constant 29 : index
    %356 = memref.load %arg2[%c29_90] : memref<100xf32, #tpu.memory_space<smem>>
    %357 = vector.broadcast %356 : f32 to vector<8x128xf32>
    %358 = arith.addf %355, %357 : vector<8x128xf32>
    %cst_91 = arith.constant 0.000000e+00 : f32
    %359 = vector.broadcast %cst_91 : f32 to vector<8x128xf32>
    %360 = arith.maximumf %358, %359 : vector<8x128xf32>
    %c29_92 = arith.constant 29 : index
    %361 = memref.load %arg3[%c29_92] : memref<100xf32, #tpu.memory_space<smem>>
    %362 = vector.broadcast %361 : f32 to vector<8x128xf32>
    %363 = arith.mulf %360, %362 : vector<8x128xf32>
    %364 = arith.addf %352, %363 : vector<8x128xf32>
    %c30 = arith.constant 30 : index
    %365 = memref.load %arg1[%c30] : memref<100xf32, #tpu.memory_space<smem>>
    %366 = vector.broadcast %365 : f32 to vector<8x128xf32>
    %367 = arith.mulf %366, %0 : vector<8x128xf32>
    %c30_93 = arith.constant 30 : index
    %368 = memref.load %arg2[%c30_93] : memref<100xf32, #tpu.memory_space<smem>>
    %369 = vector.broadcast %368 : f32 to vector<8x128xf32>
    %370 = arith.addf %367, %369 : vector<8x128xf32>
    %cst_94 = arith.constant 0.000000e+00 : f32
    %371 = vector.broadcast %cst_94 : f32 to vector<8x128xf32>
    %372 = arith.maximumf %370, %371 : vector<8x128xf32>
    %c30_95 = arith.constant 30 : index
    %373 = memref.load %arg3[%c30_95] : memref<100xf32, #tpu.memory_space<smem>>
    %374 = vector.broadcast %373 : f32 to vector<8x128xf32>
    %375 = arith.mulf %372, %374 : vector<8x128xf32>
    %376 = arith.addf %364, %375 : vector<8x128xf32>
    %c31 = arith.constant 31 : index
    %377 = memref.load %arg1[%c31] : memref<100xf32, #tpu.memory_space<smem>>
    %378 = vector.broadcast %377 : f32 to vector<8x128xf32>
    %379 = arith.mulf %378, %0 : vector<8x128xf32>
    %c31_96 = arith.constant 31 : index
    %380 = memref.load %arg2[%c31_96] : memref<100xf32, #tpu.memory_space<smem>>
    %381 = vector.broadcast %380 : f32 to vector<8x128xf32>
    %382 = arith.addf %379, %381 : vector<8x128xf32>
    %cst_97 = arith.constant 0.000000e+00 : f32
    %383 = vector.broadcast %cst_97 : f32 to vector<8x128xf32>
    %384 = arith.maximumf %382, %383 : vector<8x128xf32>
    %c31_98 = arith.constant 31 : index
    %385 = memref.load %arg3[%c31_98] : memref<100xf32, #tpu.memory_space<smem>>
    %386 = vector.broadcast %385 : f32 to vector<8x128xf32>
    %387 = arith.mulf %384, %386 : vector<8x128xf32>
    %388 = arith.addf %376, %387 : vector<8x128xf32>
    %c32 = arith.constant 32 : index
    %389 = memref.load %arg1[%c32] : memref<100xf32, #tpu.memory_space<smem>>
    %390 = vector.broadcast %389 : f32 to vector<8x128xf32>
    %391 = arith.mulf %390, %0 : vector<8x128xf32>
    %c32_99 = arith.constant 32 : index
    %392 = memref.load %arg2[%c32_99] : memref<100xf32, #tpu.memory_space<smem>>
    %393 = vector.broadcast %392 : f32 to vector<8x128xf32>
    %394 = arith.addf %391, %393 : vector<8x128xf32>
    %cst_100 = arith.constant 0.000000e+00 : f32
    %395 = vector.broadcast %cst_100 : f32 to vector<8x128xf32>
    %396 = arith.maximumf %394, %395 : vector<8x128xf32>
    %c32_101 = arith.constant 32 : index
    %397 = memref.load %arg3[%c32_101] : memref<100xf32, #tpu.memory_space<smem>>
    %398 = vector.broadcast %397 : f32 to vector<8x128xf32>
    %399 = arith.mulf %396, %398 : vector<8x128xf32>
    %400 = arith.addf %388, %399 : vector<8x128xf32>
    %c33 = arith.constant 33 : index
    %401 = memref.load %arg1[%c33] : memref<100xf32, #tpu.memory_space<smem>>
    %402 = vector.broadcast %401 : f32 to vector<8x128xf32>
    %403 = arith.mulf %402, %0 : vector<8x128xf32>
    %c33_102 = arith.constant 33 : index
    %404 = memref.load %arg2[%c33_102] : memref<100xf32, #tpu.memory_space<smem>>
    %405 = vector.broadcast %404 : f32 to vector<8x128xf32>
    %406 = arith.addf %403, %405 : vector<8x128xf32>
    %cst_103 = arith.constant 0.000000e+00 : f32
    %407 = vector.broadcast %cst_103 : f32 to vector<8x128xf32>
    %408 = arith.maximumf %406, %407 : vector<8x128xf32>
    %c33_104 = arith.constant 33 : index
    %409 = memref.load %arg3[%c33_104] : memref<100xf32, #tpu.memory_space<smem>>
    %410 = vector.broadcast %409 : f32 to vector<8x128xf32>
    %411 = arith.mulf %408, %410 : vector<8x128xf32>
    %412 = arith.addf %400, %411 : vector<8x128xf32>
    %c34 = arith.constant 34 : index
    %413 = memref.load %arg1[%c34] : memref<100xf32, #tpu.memory_space<smem>>
    %414 = vector.broadcast %413 : f32 to vector<8x128xf32>
    %415 = arith.mulf %414, %0 : vector<8x128xf32>
    %c34_105 = arith.constant 34 : index
    %416 = memref.load %arg2[%c34_105] : memref<100xf32, #tpu.memory_space<smem>>
    %417 = vector.broadcast %416 : f32 to vector<8x128xf32>
    %418 = arith.addf %415, %417 : vector<8x128xf32>
    %cst_106 = arith.constant 0.000000e+00 : f32
    %419 = vector.broadcast %cst_106 : f32 to vector<8x128xf32>
    %420 = arith.maximumf %418, %419 : vector<8x128xf32>
    %c34_107 = arith.constant 34 : index
    %421 = memref.load %arg3[%c34_107] : memref<100xf32, #tpu.memory_space<smem>>
    %422 = vector.broadcast %421 : f32 to vector<8x128xf32>
    %423 = arith.mulf %420, %422 : vector<8x128xf32>
    %424 = arith.addf %412, %423 : vector<8x128xf32>
    %c35 = arith.constant 35 : index
    %425 = memref.load %arg1[%c35] : memref<100xf32, #tpu.memory_space<smem>>
    %426 = vector.broadcast %425 : f32 to vector<8x128xf32>
    %427 = arith.mulf %426, %0 : vector<8x128xf32>
    %c35_108 = arith.constant 35 : index
    %428 = memref.load %arg2[%c35_108] : memref<100xf32, #tpu.memory_space<smem>>
    %429 = vector.broadcast %428 : f32 to vector<8x128xf32>
    %430 = arith.addf %427, %429 : vector<8x128xf32>
    %cst_109 = arith.constant 0.000000e+00 : f32
    %431 = vector.broadcast %cst_109 : f32 to vector<8x128xf32>
    %432 = arith.maximumf %430, %431 : vector<8x128xf32>
    %c35_110 = arith.constant 35 : index
    %433 = memref.load %arg3[%c35_110] : memref<100xf32, #tpu.memory_space<smem>>
    %434 = vector.broadcast %433 : f32 to vector<8x128xf32>
    %435 = arith.mulf %432, %434 : vector<8x128xf32>
    %436 = arith.addf %424, %435 : vector<8x128xf32>
    %c36 = arith.constant 36 : index
    %437 = memref.load %arg1[%c36] : memref<100xf32, #tpu.memory_space<smem>>
    %438 = vector.broadcast %437 : f32 to vector<8x128xf32>
    %439 = arith.mulf %438, %0 : vector<8x128xf32>
    %c36_111 = arith.constant 36 : index
    %440 = memref.load %arg2[%c36_111] : memref<100xf32, #tpu.memory_space<smem>>
    %441 = vector.broadcast %440 : f32 to vector<8x128xf32>
    %442 = arith.addf %439, %441 : vector<8x128xf32>
    %cst_112 = arith.constant 0.000000e+00 : f32
    %443 = vector.broadcast %cst_112 : f32 to vector<8x128xf32>
    %444 = arith.maximumf %442, %443 : vector<8x128xf32>
    %c36_113 = arith.constant 36 : index
    %445 = memref.load %arg3[%c36_113] : memref<100xf32, #tpu.memory_space<smem>>
    %446 = vector.broadcast %445 : f32 to vector<8x128xf32>
    %447 = arith.mulf %444, %446 : vector<8x128xf32>
    %448 = arith.addf %436, %447 : vector<8x128xf32>
    %c37 = arith.constant 37 : index
    %449 = memref.load %arg1[%c37] : memref<100xf32, #tpu.memory_space<smem>>
    %450 = vector.broadcast %449 : f32 to vector<8x128xf32>
    %451 = arith.mulf %450, %0 : vector<8x128xf32>
    %c37_114 = arith.constant 37 : index
    %452 = memref.load %arg2[%c37_114] : memref<100xf32, #tpu.memory_space<smem>>
    %453 = vector.broadcast %452 : f32 to vector<8x128xf32>
    %454 = arith.addf %451, %453 : vector<8x128xf32>
    %cst_115 = arith.constant 0.000000e+00 : f32
    %455 = vector.broadcast %cst_115 : f32 to vector<8x128xf32>
    %456 = arith.maximumf %454, %455 : vector<8x128xf32>
    %c37_116 = arith.constant 37 : index
    %457 = memref.load %arg3[%c37_116] : memref<100xf32, #tpu.memory_space<smem>>
    %458 = vector.broadcast %457 : f32 to vector<8x128xf32>
    %459 = arith.mulf %456, %458 : vector<8x128xf32>
    %460 = arith.addf %448, %459 : vector<8x128xf32>
    %c38 = arith.constant 38 : index
    %461 = memref.load %arg1[%c38] : memref<100xf32, #tpu.memory_space<smem>>
    %462 = vector.broadcast %461 : f32 to vector<8x128xf32>
    %463 = arith.mulf %462, %0 : vector<8x128xf32>
    %c38_117 = arith.constant 38 : index
    %464 = memref.load %arg2[%c38_117] : memref<100xf32, #tpu.memory_space<smem>>
    %465 = vector.broadcast %464 : f32 to vector<8x128xf32>
    %466 = arith.addf %463, %465 : vector<8x128xf32>
    %cst_118 = arith.constant 0.000000e+00 : f32
    %467 = vector.broadcast %cst_118 : f32 to vector<8x128xf32>
    %468 = arith.maximumf %466, %467 : vector<8x128xf32>
    %c38_119 = arith.constant 38 : index
    %469 = memref.load %arg3[%c38_119] : memref<100xf32, #tpu.memory_space<smem>>
    %470 = vector.broadcast %469 : f32 to vector<8x128xf32>
    %471 = arith.mulf %468, %470 : vector<8x128xf32>
    %472 = arith.addf %460, %471 : vector<8x128xf32>
    %c39 = arith.constant 39 : index
    %473 = memref.load %arg1[%c39] : memref<100xf32, #tpu.memory_space<smem>>
    %474 = vector.broadcast %473 : f32 to vector<8x128xf32>
    %475 = arith.mulf %474, %0 : vector<8x128xf32>
    %c39_120 = arith.constant 39 : index
    %476 = memref.load %arg2[%c39_120] : memref<100xf32, #tpu.memory_space<smem>>
    %477 = vector.broadcast %476 : f32 to vector<8x128xf32>
    %478 = arith.addf %475, %477 : vector<8x128xf32>
    %cst_121 = arith.constant 0.000000e+00 : f32
    %479 = vector.broadcast %cst_121 : f32 to vector<8x128xf32>
    %480 = arith.maximumf %478, %479 : vector<8x128xf32>
    %c39_122 = arith.constant 39 : index
    %481 = memref.load %arg3[%c39_122] : memref<100xf32, #tpu.memory_space<smem>>
    %482 = vector.broadcast %481 : f32 to vector<8x128xf32>
    %483 = arith.mulf %480, %482 : vector<8x128xf32>
    %484 = arith.addf %472, %483 : vector<8x128xf32>
    %c40 = arith.constant 40 : index
    %485 = memref.load %arg1[%c40] : memref<100xf32, #tpu.memory_space<smem>>
    %486 = vector.broadcast %485 : f32 to vector<8x128xf32>
    %487 = arith.mulf %486, %0 : vector<8x128xf32>
    %c40_123 = arith.constant 40 : index
    %488 = memref.load %arg2[%c40_123] : memref<100xf32, #tpu.memory_space<smem>>
    %489 = vector.broadcast %488 : f32 to vector<8x128xf32>
    %490 = arith.addf %487, %489 : vector<8x128xf32>
    %cst_124 = arith.constant 0.000000e+00 : f32
    %491 = vector.broadcast %cst_124 : f32 to vector<8x128xf32>
    %492 = arith.maximumf %490, %491 : vector<8x128xf32>
    %c40_125 = arith.constant 40 : index
    %493 = memref.load %arg3[%c40_125] : memref<100xf32, #tpu.memory_space<smem>>
    %494 = vector.broadcast %493 : f32 to vector<8x128xf32>
    %495 = arith.mulf %492, %494 : vector<8x128xf32>
    %496 = arith.addf %484, %495 : vector<8x128xf32>
    %c41 = arith.constant 41 : index
    %497 = memref.load %arg1[%c41] : memref<100xf32, #tpu.memory_space<smem>>
    %498 = vector.broadcast %497 : f32 to vector<8x128xf32>
    %499 = arith.mulf %498, %0 : vector<8x128xf32>
    %c41_126 = arith.constant 41 : index
    %500 = memref.load %arg2[%c41_126] : memref<100xf32, #tpu.memory_space<smem>>
    %501 = vector.broadcast %500 : f32 to vector<8x128xf32>
    %502 = arith.addf %499, %501 : vector<8x128xf32>
    %cst_127 = arith.constant 0.000000e+00 : f32
    %503 = vector.broadcast %cst_127 : f32 to vector<8x128xf32>
    %504 = arith.maximumf %502, %503 : vector<8x128xf32>
    %c41_128 = arith.constant 41 : index
    %505 = memref.load %arg3[%c41_128] : memref<100xf32, #tpu.memory_space<smem>>
    %506 = vector.broadcast %505 : f32 to vector<8x128xf32>
    %507 = arith.mulf %504, %506 : vector<8x128xf32>
    %508 = arith.addf %496, %507 : vector<8x128xf32>
    %c42 = arith.constant 42 : index
    %509 = memref.load %arg1[%c42] : memref<100xf32, #tpu.memory_space<smem>>
    %510 = vector.broadcast %509 : f32 to vector<8x128xf32>
    %511 = arith.mulf %510, %0 : vector<8x128xf32>
    %c42_129 = arith.constant 42 : index
    %512 = memref.load %arg2[%c42_129] : memref<100xf32, #tpu.memory_space<smem>>
    %513 = vector.broadcast %512 : f32 to vector<8x128xf32>
    %514 = arith.addf %511, %513 : vector<8x128xf32>
    %cst_130 = arith.constant 0.000000e+00 : f32
    %515 = vector.broadcast %cst_130 : f32 to vector<8x128xf32>
    %516 = arith.maximumf %514, %515 : vector<8x128xf32>
    %c42_131 = arith.constant 42 : index
    %517 = memref.load %arg3[%c42_131] : memref<100xf32, #tpu.memory_space<smem>>
    %518 = vector.broadcast %517 : f32 to vector<8x128xf32>
    %519 = arith.mulf %516, %518 : vector<8x128xf32>
    %520 = arith.addf %508, %519 : vector<8x128xf32>
    %c43 = arith.constant 43 : index
    %521 = memref.load %arg1[%c43] : memref<100xf32, #tpu.memory_space<smem>>
    %522 = vector.broadcast %521 : f32 to vector<8x128xf32>
    %523 = arith.mulf %522, %0 : vector<8x128xf32>
    %c43_132 = arith.constant 43 : index
    %524 = memref.load %arg2[%c43_132] : memref<100xf32, #tpu.memory_space<smem>>
    %525 = vector.broadcast %524 : f32 to vector<8x128xf32>
    %526 = arith.addf %523, %525 : vector<8x128xf32>
    %cst_133 = arith.constant 0.000000e+00 : f32
    %527 = vector.broadcast %cst_133 : f32 to vector<8x128xf32>
    %528 = arith.maximumf %526, %527 : vector<8x128xf32>
    %c43_134 = arith.constant 43 : index
    %529 = memref.load %arg3[%c43_134] : memref<100xf32, #tpu.memory_space<smem>>
    %530 = vector.broadcast %529 : f32 to vector<8x128xf32>
    %531 = arith.mulf %528, %530 : vector<8x128xf32>
    %532 = arith.addf %520, %531 : vector<8x128xf32>
    %c44 = arith.constant 44 : index
    %533 = memref.load %arg1[%c44] : memref<100xf32, #tpu.memory_space<smem>>
    %534 = vector.broadcast %533 : f32 to vector<8x128xf32>
    %535 = arith.mulf %534, %0 : vector<8x128xf32>
    %c44_135 = arith.constant 44 : index
    %536 = memref.load %arg2[%c44_135] : memref<100xf32, #tpu.memory_space<smem>>
    %537 = vector.broadcast %536 : f32 to vector<8x128xf32>
    %538 = arith.addf %535, %537 : vector<8x128xf32>
    %cst_136 = arith.constant 0.000000e+00 : f32
    %539 = vector.broadcast %cst_136 : f32 to vector<8x128xf32>
    %540 = arith.maximumf %538, %539 : vector<8x128xf32>
    %c44_137 = arith.constant 44 : index
    %541 = memref.load %arg3[%c44_137] : memref<100xf32, #tpu.memory_space<smem>>
    %542 = vector.broadcast %541 : f32 to vector<8x128xf32>
    %543 = arith.mulf %540, %542 : vector<8x128xf32>
    %544 = arith.addf %532, %543 : vector<8x128xf32>
    %c45 = arith.constant 45 : index
    %545 = memref.load %arg1[%c45] : memref<100xf32, #tpu.memory_space<smem>>
    %546 = vector.broadcast %545 : f32 to vector<8x128xf32>
    %547 = arith.mulf %546, %0 : vector<8x128xf32>
    %c45_138 = arith.constant 45 : index
    %548 = memref.load %arg2[%c45_138] : memref<100xf32, #tpu.memory_space<smem>>
    %549 = vector.broadcast %548 : f32 to vector<8x128xf32>
    %550 = arith.addf %547, %549 : vector<8x128xf32>
    %cst_139 = arith.constant 0.000000e+00 : f32
    %551 = vector.broadcast %cst_139 : f32 to vector<8x128xf32>
    %552 = arith.maximumf %550, %551 : vector<8x128xf32>
    %c45_140 = arith.constant 45 : index
    %553 = memref.load %arg3[%c45_140] : memref<100xf32, #tpu.memory_space<smem>>
    %554 = vector.broadcast %553 : f32 to vector<8x128xf32>
    %555 = arith.mulf %552, %554 : vector<8x128xf32>
    %556 = arith.addf %544, %555 : vector<8x128xf32>
    %c46 = arith.constant 46 : index
    %557 = memref.load %arg1[%c46] : memref<100xf32, #tpu.memory_space<smem>>
    %558 = vector.broadcast %557 : f32 to vector<8x128xf32>
    %559 = arith.mulf %558, %0 : vector<8x128xf32>
    %c46_141 = arith.constant 46 : index
    %560 = memref.load %arg2[%c46_141] : memref<100xf32, #tpu.memory_space<smem>>
    %561 = vector.broadcast %560 : f32 to vector<8x128xf32>
    %562 = arith.addf %559, %561 : vector<8x128xf32>
    %cst_142 = arith.constant 0.000000e+00 : f32
    %563 = vector.broadcast %cst_142 : f32 to vector<8x128xf32>
    %564 = arith.maximumf %562, %563 : vector<8x128xf32>
    %c46_143 = arith.constant 46 : index
    %565 = memref.load %arg3[%c46_143] : memref<100xf32, #tpu.memory_space<smem>>
    %566 = vector.broadcast %565 : f32 to vector<8x128xf32>
    %567 = arith.mulf %564, %566 : vector<8x128xf32>
    %568 = arith.addf %556, %567 : vector<8x128xf32>
    %c47 = arith.constant 47 : index
    %569 = memref.load %arg1[%c47] : memref<100xf32, #tpu.memory_space<smem>>
    %570 = vector.broadcast %569 : f32 to vector<8x128xf32>
    %571 = arith.mulf %570, %0 : vector<8x128xf32>
    %c47_144 = arith.constant 47 : index
    %572 = memref.load %arg2[%c47_144] : memref<100xf32, #tpu.memory_space<smem>>
    %573 = vector.broadcast %572 : f32 to vector<8x128xf32>
    %574 = arith.addf %571, %573 : vector<8x128xf32>
    %cst_145 = arith.constant 0.000000e+00 : f32
    %575 = vector.broadcast %cst_145 : f32 to vector<8x128xf32>
    %576 = arith.maximumf %574, %575 : vector<8x128xf32>
    %c47_146 = arith.constant 47 : index
    %577 = memref.load %arg3[%c47_146] : memref<100xf32, #tpu.memory_space<smem>>
    %578 = vector.broadcast %577 : f32 to vector<8x128xf32>
    %579 = arith.mulf %576, %578 : vector<8x128xf32>
    %580 = arith.addf %568, %579 : vector<8x128xf32>
    %c48 = arith.constant 48 : index
    %581 = memref.load %arg1[%c48] : memref<100xf32, #tpu.memory_space<smem>>
    %582 = vector.broadcast %581 : f32 to vector<8x128xf32>
    %583 = arith.mulf %582, %0 : vector<8x128xf32>
    %c48_147 = arith.constant 48 : index
    %584 = memref.load %arg2[%c48_147] : memref<100xf32, #tpu.memory_space<smem>>
    %585 = vector.broadcast %584 : f32 to vector<8x128xf32>
    %586 = arith.addf %583, %585 : vector<8x128xf32>
    %cst_148 = arith.constant 0.000000e+00 : f32
    %587 = vector.broadcast %cst_148 : f32 to vector<8x128xf32>
    %588 = arith.maximumf %586, %587 : vector<8x128xf32>
    %c48_149 = arith.constant 48 : index
    %589 = memref.load %arg3[%c48_149] : memref<100xf32, #tpu.memory_space<smem>>
    %590 = vector.broadcast %589 : f32 to vector<8x128xf32>
    %591 = arith.mulf %588, %590 : vector<8x128xf32>
    %592 = arith.addf %580, %591 : vector<8x128xf32>
    %c49 = arith.constant 49 : index
    %593 = memref.load %arg1[%c49] : memref<100xf32, #tpu.memory_space<smem>>
    %594 = vector.broadcast %593 : f32 to vector<8x128xf32>
    %595 = arith.mulf %594, %0 : vector<8x128xf32>
    %c49_150 = arith.constant 49 : index
    %596 = memref.load %arg2[%c49_150] : memref<100xf32, #tpu.memory_space<smem>>
    %597 = vector.broadcast %596 : f32 to vector<8x128xf32>
    %598 = arith.addf %595, %597 : vector<8x128xf32>
    %cst_151 = arith.constant 0.000000e+00 : f32
    %599 = vector.broadcast %cst_151 : f32 to vector<8x128xf32>
    %600 = arith.maximumf %598, %599 : vector<8x128xf32>
    %c49_152 = arith.constant 49 : index
    %601 = memref.load %arg3[%c49_152] : memref<100xf32, #tpu.memory_space<smem>>
    %602 = vector.broadcast %601 : f32 to vector<8x128xf32>
    %603 = arith.mulf %600, %602 : vector<8x128xf32>
    %604 = arith.addf %592, %603 : vector<8x128xf32>
    %c50 = arith.constant 50 : index
    %605 = memref.load %arg1[%c50] : memref<100xf32, #tpu.memory_space<smem>>
    %606 = vector.broadcast %605 : f32 to vector<8x128xf32>
    %607 = arith.mulf %606, %0 : vector<8x128xf32>
    %c50_153 = arith.constant 50 : index
    %608 = memref.load %arg2[%c50_153] : memref<100xf32, #tpu.memory_space<smem>>
    %609 = vector.broadcast %608 : f32 to vector<8x128xf32>
    %610 = arith.addf %607, %609 : vector<8x128xf32>
    %cst_154 = arith.constant 0.000000e+00 : f32
    %611 = vector.broadcast %cst_154 : f32 to vector<8x128xf32>
    %612 = arith.maximumf %610, %611 : vector<8x128xf32>
    %c50_155 = arith.constant 50 : index
    %613 = memref.load %arg3[%c50_155] : memref<100xf32, #tpu.memory_space<smem>>
    %614 = vector.broadcast %613 : f32 to vector<8x128xf32>
    %615 = arith.mulf %612, %614 : vector<8x128xf32>
    %616 = arith.addf %604, %615 : vector<8x128xf32>
    %c51 = arith.constant 51 : index
    %617 = memref.load %arg1[%c51] : memref<100xf32, #tpu.memory_space<smem>>
    %618 = vector.broadcast %617 : f32 to vector<8x128xf32>
    %619 = arith.mulf %618, %0 : vector<8x128xf32>
    %c51_156 = arith.constant 51 : index
    %620 = memref.load %arg2[%c51_156] : memref<100xf32, #tpu.memory_space<smem>>
    %621 = vector.broadcast %620 : f32 to vector<8x128xf32>
    %622 = arith.addf %619, %621 : vector<8x128xf32>
    %cst_157 = arith.constant 0.000000e+00 : f32
    %623 = vector.broadcast %cst_157 : f32 to vector<8x128xf32>
    %624 = arith.maximumf %622, %623 : vector<8x128xf32>
    %c51_158 = arith.constant 51 : index
    %625 = memref.load %arg3[%c51_158] : memref<100xf32, #tpu.memory_space<smem>>
    %626 = vector.broadcast %625 : f32 to vector<8x128xf32>
    %627 = arith.mulf %624, %626 : vector<8x128xf32>
    %628 = arith.addf %616, %627 : vector<8x128xf32>
    %c52 = arith.constant 52 : index
    %629 = memref.load %arg1[%c52] : memref<100xf32, #tpu.memory_space<smem>>
    %630 = vector.broadcast %629 : f32 to vector<8x128xf32>
    %631 = arith.mulf %630, %0 : vector<8x128xf32>
    %c52_159 = arith.constant 52 : index
    %632 = memref.load %arg2[%c52_159] : memref<100xf32, #tpu.memory_space<smem>>
    %633 = vector.broadcast %632 : f32 to vector<8x128xf32>
    %634 = arith.addf %631, %633 : vector<8x128xf32>
    %cst_160 = arith.constant 0.000000e+00 : f32
    %635 = vector.broadcast %cst_160 : f32 to vector<8x128xf32>
    %636 = arith.maximumf %634, %635 : vector<8x128xf32>
    %c52_161 = arith.constant 52 : index
    %637 = memref.load %arg3[%c52_161] : memref<100xf32, #tpu.memory_space<smem>>
    %638 = vector.broadcast %637 : f32 to vector<8x128xf32>
    %639 = arith.mulf %636, %638 : vector<8x128xf32>
    %640 = arith.addf %628, %639 : vector<8x128xf32>
    %c53 = arith.constant 53 : index
    %641 = memref.load %arg1[%c53] : memref<100xf32, #tpu.memory_space<smem>>
    %642 = vector.broadcast %641 : f32 to vector<8x128xf32>
    %643 = arith.mulf %642, %0 : vector<8x128xf32>
    %c53_162 = arith.constant 53 : index
    %644 = memref.load %arg2[%c53_162] : memref<100xf32, #tpu.memory_space<smem>>
    %645 = vector.broadcast %644 : f32 to vector<8x128xf32>
    %646 = arith.addf %643, %645 : vector<8x128xf32>
    %cst_163 = arith.constant 0.000000e+00 : f32
    %647 = vector.broadcast %cst_163 : f32 to vector<8x128xf32>
    %648 = arith.maximumf %646, %647 : vector<8x128xf32>
    %c53_164 = arith.constant 53 : index
    %649 = memref.load %arg3[%c53_164] : memref<100xf32, #tpu.memory_space<smem>>
    %650 = vector.broadcast %649 : f32 to vector<8x128xf32>
    %651 = arith.mulf %648, %650 : vector<8x128xf32>
    %652 = arith.addf %640, %651 : vector<8x128xf32>
    %c54 = arith.constant 54 : index
    %653 = memref.load %arg1[%c54] : memref<100xf32, #tpu.memory_space<smem>>
    %654 = vector.broadcast %653 : f32 to vector<8x128xf32>
    %655 = arith.mulf %654, %0 : vector<8x128xf32>
    %c54_165 = arith.constant 54 : index
    %656 = memref.load %arg2[%c54_165] : memref<100xf32, #tpu.memory_space<smem>>
    %657 = vector.broadcast %656 : f32 to vector<8x128xf32>
    %658 = arith.addf %655, %657 : vector<8x128xf32>
    %cst_166 = arith.constant 0.000000e+00 : f32
    %659 = vector.broadcast %cst_166 : f32 to vector<8x128xf32>
    %660 = arith.maximumf %658, %659 : vector<8x128xf32>
    %c54_167 = arith.constant 54 : index
    %661 = memref.load %arg3[%c54_167] : memref<100xf32, #tpu.memory_space<smem>>
    %662 = vector.broadcast %661 : f32 to vector<8x128xf32>
    %663 = arith.mulf %660, %662 : vector<8x128xf32>
    %664 = arith.addf %652, %663 : vector<8x128xf32>
    %c55 = arith.constant 55 : index
    %665 = memref.load %arg1[%c55] : memref<100xf32, #tpu.memory_space<smem>>
    %666 = vector.broadcast %665 : f32 to vector<8x128xf32>
    %667 = arith.mulf %666, %0 : vector<8x128xf32>
    %c55_168 = arith.constant 55 : index
    %668 = memref.load %arg2[%c55_168] : memref<100xf32, #tpu.memory_space<smem>>
    %669 = vector.broadcast %668 : f32 to vector<8x128xf32>
    %670 = arith.addf %667, %669 : vector<8x128xf32>
    %cst_169 = arith.constant 0.000000e+00 : f32
    %671 = vector.broadcast %cst_169 : f32 to vector<8x128xf32>
    %672 = arith.maximumf %670, %671 : vector<8x128xf32>
    %c55_170 = arith.constant 55 : index
    %673 = memref.load %arg3[%c55_170] : memref<100xf32, #tpu.memory_space<smem>>
    %674 = vector.broadcast %673 : f32 to vector<8x128xf32>
    %675 = arith.mulf %672, %674 : vector<8x128xf32>
    %676 = arith.addf %664, %675 : vector<8x128xf32>
    %c56 = arith.constant 56 : index
    %677 = memref.load %arg1[%c56] : memref<100xf32, #tpu.memory_space<smem>>
    %678 = vector.broadcast %677 : f32 to vector<8x128xf32>
    %679 = arith.mulf %678, %0 : vector<8x128xf32>
    %c56_171 = arith.constant 56 : index
    %680 = memref.load %arg2[%c56_171] : memref<100xf32, #tpu.memory_space<smem>>
    %681 = vector.broadcast %680 : f32 to vector<8x128xf32>
    %682 = arith.addf %679, %681 : vector<8x128xf32>
    %cst_172 = arith.constant 0.000000e+00 : f32
    %683 = vector.broadcast %cst_172 : f32 to vector<8x128xf32>
    %684 = arith.maximumf %682, %683 : vector<8x128xf32>
    %c56_173 = arith.constant 56 : index
    %685 = memref.load %arg3[%c56_173] : memref<100xf32, #tpu.memory_space<smem>>
    %686 = vector.broadcast %685 : f32 to vector<8x128xf32>
    %687 = arith.mulf %684, %686 : vector<8x128xf32>
    %688 = arith.addf %676, %687 : vector<8x128xf32>
    %c57 = arith.constant 57 : index
    %689 = memref.load %arg1[%c57] : memref<100xf32, #tpu.memory_space<smem>>
    %690 = vector.broadcast %689 : f32 to vector<8x128xf32>
    %691 = arith.mulf %690, %0 : vector<8x128xf32>
    %c57_174 = arith.constant 57 : index
    %692 = memref.load %arg2[%c57_174] : memref<100xf32, #tpu.memory_space<smem>>
    %693 = vector.broadcast %692 : f32 to vector<8x128xf32>
    %694 = arith.addf %691, %693 : vector<8x128xf32>
    %cst_175 = arith.constant 0.000000e+00 : f32
    %695 = vector.broadcast %cst_175 : f32 to vector<8x128xf32>
    %696 = arith.maximumf %694, %695 : vector<8x128xf32>
    %c57_176 = arith.constant 57 : index
    %697 = memref.load %arg3[%c57_176] : memref<100xf32, #tpu.memory_space<smem>>
    %698 = vector.broadcast %697 : f32 to vector<8x128xf32>
    %699 = arith.mulf %696, %698 : vector<8x128xf32>
    %700 = arith.addf %688, %699 : vector<8x128xf32>
    %c58 = arith.constant 58 : index
    %701 = memref.load %arg1[%c58] : memref<100xf32, #tpu.memory_space<smem>>
    %702 = vector.broadcast %701 : f32 to vector<8x128xf32>
    %703 = arith.mulf %702, %0 : vector<8x128xf32>
    %c58_177 = arith.constant 58 : index
    %704 = memref.load %arg2[%c58_177] : memref<100xf32, #tpu.memory_space<smem>>
    %705 = vector.broadcast %704 : f32 to vector<8x128xf32>
    %706 = arith.addf %703, %705 : vector<8x128xf32>
    %cst_178 = arith.constant 0.000000e+00 : f32
    %707 = vector.broadcast %cst_178 : f32 to vector<8x128xf32>
    %708 = arith.maximumf %706, %707 : vector<8x128xf32>
    %c58_179 = arith.constant 58 : index
    %709 = memref.load %arg3[%c58_179] : memref<100xf32, #tpu.memory_space<smem>>
    %710 = vector.broadcast %709 : f32 to vector<8x128xf32>
    %711 = arith.mulf %708, %710 : vector<8x128xf32>
    %712 = arith.addf %700, %711 : vector<8x128xf32>
    %c59 = arith.constant 59 : index
    %713 = memref.load %arg1[%c59] : memref<100xf32, #tpu.memory_space<smem>>
    %714 = vector.broadcast %713 : f32 to vector<8x128xf32>
    %715 = arith.mulf %714, %0 : vector<8x128xf32>
    %c59_180 = arith.constant 59 : index
    %716 = memref.load %arg2[%c59_180] : memref<100xf32, #tpu.memory_space<smem>>
    %717 = vector.broadcast %716 : f32 to vector<8x128xf32>
    %718 = arith.addf %715, %717 : vector<8x128xf32>
    %cst_181 = arith.constant 0.000000e+00 : f32
    %719 = vector.broadcast %cst_181 : f32 to vector<8x128xf32>
    %720 = arith.maximumf %718, %719 : vector<8x128xf32>
    %c59_182 = arith.constant 59 : index
    %721 = memref.load %arg3[%c59_182] : memref<100xf32, #tpu.memory_space<smem>>
    %722 = vector.broadcast %721 : f32 to vector<8x128xf32>
    %723 = arith.mulf %720, %722 : vector<8x128xf32>
    %724 = arith.addf %712, %723 : vector<8x128xf32>
    %c60 = arith.constant 60 : index
    %725 = memref.load %arg1[%c60] : memref<100xf32, #tpu.memory_space<smem>>
    %726 = vector.broadcast %725 : f32 to vector<8x128xf32>
    %727 = arith.mulf %726, %0 : vector<8x128xf32>
    %c60_183 = arith.constant 60 : index
    %728 = memref.load %arg2[%c60_183] : memref<100xf32, #tpu.memory_space<smem>>
    %729 = vector.broadcast %728 : f32 to vector<8x128xf32>
    %730 = arith.addf %727, %729 : vector<8x128xf32>
    %cst_184 = arith.constant 0.000000e+00 : f32
    %731 = vector.broadcast %cst_184 : f32 to vector<8x128xf32>
    %732 = arith.maximumf %730, %731 : vector<8x128xf32>
    %c60_185 = arith.constant 60 : index
    %733 = memref.load %arg3[%c60_185] : memref<100xf32, #tpu.memory_space<smem>>
    %734 = vector.broadcast %733 : f32 to vector<8x128xf32>
    %735 = arith.mulf %732, %734 : vector<8x128xf32>
    %736 = arith.addf %724, %735 : vector<8x128xf32>
    %c61 = arith.constant 61 : index
    %737 = memref.load %arg1[%c61] : memref<100xf32, #tpu.memory_space<smem>>
    %738 = vector.broadcast %737 : f32 to vector<8x128xf32>
    %739 = arith.mulf %738, %0 : vector<8x128xf32>
    %c61_186 = arith.constant 61 : index
    %740 = memref.load %arg2[%c61_186] : memref<100xf32, #tpu.memory_space<smem>>
    %741 = vector.broadcast %740 : f32 to vector<8x128xf32>
    %742 = arith.addf %739, %741 : vector<8x128xf32>
    %cst_187 = arith.constant 0.000000e+00 : f32
    %743 = vector.broadcast %cst_187 : f32 to vector<8x128xf32>
    %744 = arith.maximumf %742, %743 : vector<8x128xf32>
    %c61_188 = arith.constant 61 : index
    %745 = memref.load %arg3[%c61_188] : memref<100xf32, #tpu.memory_space<smem>>
    %746 = vector.broadcast %745 : f32 to vector<8x128xf32>
    %747 = arith.mulf %744, %746 : vector<8x128xf32>
    %748 = arith.addf %736, %747 : vector<8x128xf32>
    %c62 = arith.constant 62 : index
    %749 = memref.load %arg1[%c62] : memref<100xf32, #tpu.memory_space<smem>>
    %750 = vector.broadcast %749 : f32 to vector<8x128xf32>
    %751 = arith.mulf %750, %0 : vector<8x128xf32>
    %c62_189 = arith.constant 62 : index
    %752 = memref.load %arg2[%c62_189] : memref<100xf32, #tpu.memory_space<smem>>
    %753 = vector.broadcast %752 : f32 to vector<8x128xf32>
    %754 = arith.addf %751, %753 : vector<8x128xf32>
    %cst_190 = arith.constant 0.000000e+00 : f32
    %755 = vector.broadcast %cst_190 : f32 to vector<8x128xf32>
    %756 = arith.maximumf %754, %755 : vector<8x128xf32>
    %c62_191 = arith.constant 62 : index
    %757 = memref.load %arg3[%c62_191] : memref<100xf32, #tpu.memory_space<smem>>
    %758 = vector.broadcast %757 : f32 to vector<8x128xf32>
    %759 = arith.mulf %756, %758 : vector<8x128xf32>
    %760 = arith.addf %748, %759 : vector<8x128xf32>
    %c63 = arith.constant 63 : index
    %761 = memref.load %arg1[%c63] : memref<100xf32, #tpu.memory_space<smem>>
    %762 = vector.broadcast %761 : f32 to vector<8x128xf32>
    %763 = arith.mulf %762, %0 : vector<8x128xf32>
    %c63_192 = arith.constant 63 : index
    %764 = memref.load %arg2[%c63_192] : memref<100xf32, #tpu.memory_space<smem>>
    %765 = vector.broadcast %764 : f32 to vector<8x128xf32>
    %766 = arith.addf %763, %765 : vector<8x128xf32>
    %cst_193 = arith.constant 0.000000e+00 : f32
    %767 = vector.broadcast %cst_193 : f32 to vector<8x128xf32>
    %768 = arith.maximumf %766, %767 : vector<8x128xf32>
    %c63_194 = arith.constant 63 : index
    %769 = memref.load %arg3[%c63_194] : memref<100xf32, #tpu.memory_space<smem>>
    %770 = vector.broadcast %769 : f32 to vector<8x128xf32>
    %771 = arith.mulf %768, %770 : vector<8x128xf32>
    %772 = arith.addf %760, %771 : vector<8x128xf32>
    %c64 = arith.constant 64 : index
    %773 = memref.load %arg1[%c64] : memref<100xf32, #tpu.memory_space<smem>>
    %774 = vector.broadcast %773 : f32 to vector<8x128xf32>
    %775 = arith.mulf %774, %0 : vector<8x128xf32>
    %c64_195 = arith.constant 64 : index
    %776 = memref.load %arg2[%c64_195] : memref<100xf32, #tpu.memory_space<smem>>
    %777 = vector.broadcast %776 : f32 to vector<8x128xf32>
    %778 = arith.addf %775, %777 : vector<8x128xf32>
    %cst_196 = arith.constant 0.000000e+00 : f32
    %779 = vector.broadcast %cst_196 : f32 to vector<8x128xf32>
    %780 = arith.maximumf %778, %779 : vector<8x128xf32>
    %c64_197 = arith.constant 64 : index
    %781 = memref.load %arg3[%c64_197] : memref<100xf32, #tpu.memory_space<smem>>
    %782 = vector.broadcast %781 : f32 to vector<8x128xf32>
    %783 = arith.mulf %780, %782 : vector<8x128xf32>
    %784 = arith.addf %772, %783 : vector<8x128xf32>
    %c65 = arith.constant 65 : index
    %785 = memref.load %arg1[%c65] : memref<100xf32, #tpu.memory_space<smem>>
    %786 = vector.broadcast %785 : f32 to vector<8x128xf32>
    %787 = arith.mulf %786, %0 : vector<8x128xf32>
    %c65_198 = arith.constant 65 : index
    %788 = memref.load %arg2[%c65_198] : memref<100xf32, #tpu.memory_space<smem>>
    %789 = vector.broadcast %788 : f32 to vector<8x128xf32>
    %790 = arith.addf %787, %789 : vector<8x128xf32>
    %cst_199 = arith.constant 0.000000e+00 : f32
    %791 = vector.broadcast %cst_199 : f32 to vector<8x128xf32>
    %792 = arith.maximumf %790, %791 : vector<8x128xf32>
    %c65_200 = arith.constant 65 : index
    %793 = memref.load %arg3[%c65_200] : memref<100xf32, #tpu.memory_space<smem>>
    %794 = vector.broadcast %793 : f32 to vector<8x128xf32>
    %795 = arith.mulf %792, %794 : vector<8x128xf32>
    %796 = arith.addf %784, %795 : vector<8x128xf32>
    %c66 = arith.constant 66 : index
    %797 = memref.load %arg1[%c66] : memref<100xf32, #tpu.memory_space<smem>>
    %798 = vector.broadcast %797 : f32 to vector<8x128xf32>
    %799 = arith.mulf %798, %0 : vector<8x128xf32>
    %c66_201 = arith.constant 66 : index
    %800 = memref.load %arg2[%c66_201] : memref<100xf32, #tpu.memory_space<smem>>
    %801 = vector.broadcast %800 : f32 to vector<8x128xf32>
    %802 = arith.addf %799, %801 : vector<8x128xf32>
    %cst_202 = arith.constant 0.000000e+00 : f32
    %803 = vector.broadcast %cst_202 : f32 to vector<8x128xf32>
    %804 = arith.maximumf %802, %803 : vector<8x128xf32>
    %c66_203 = arith.constant 66 : index
    %805 = memref.load %arg3[%c66_203] : memref<100xf32, #tpu.memory_space<smem>>
    %806 = vector.broadcast %805 : f32 to vector<8x128xf32>
    %807 = arith.mulf %804, %806 : vector<8x128xf32>
    %808 = arith.addf %796, %807 : vector<8x128xf32>
    %c67 = arith.constant 67 : index
    %809 = memref.load %arg1[%c67] : memref<100xf32, #tpu.memory_space<smem>>
    %810 = vector.broadcast %809 : f32 to vector<8x128xf32>
    %811 = arith.mulf %810, %0 : vector<8x128xf32>
    %c67_204 = arith.constant 67 : index
    %812 = memref.load %arg2[%c67_204] : memref<100xf32, #tpu.memory_space<smem>>
    %813 = vector.broadcast %812 : f32 to vector<8x128xf32>
    %814 = arith.addf %811, %813 : vector<8x128xf32>
    %cst_205 = arith.constant 0.000000e+00 : f32
    %815 = vector.broadcast %cst_205 : f32 to vector<8x128xf32>
    %816 = arith.maximumf %814, %815 : vector<8x128xf32>
    %c67_206 = arith.constant 67 : index
    %817 = memref.load %arg3[%c67_206] : memref<100xf32, #tpu.memory_space<smem>>
    %818 = vector.broadcast %817 : f32 to vector<8x128xf32>
    %819 = arith.mulf %816, %818 : vector<8x128xf32>
    %820 = arith.addf %808, %819 : vector<8x128xf32>
    %c68 = arith.constant 68 : index
    %821 = memref.load %arg1[%c68] : memref<100xf32, #tpu.memory_space<smem>>
    %822 = vector.broadcast %821 : f32 to vector<8x128xf32>
    %823 = arith.mulf %822, %0 : vector<8x128xf32>
    %c68_207 = arith.constant 68 : index
    %824 = memref.load %arg2[%c68_207] : memref<100xf32, #tpu.memory_space<smem>>
    %825 = vector.broadcast %824 : f32 to vector<8x128xf32>
    %826 = arith.addf %823, %825 : vector<8x128xf32>
    %cst_208 = arith.constant 0.000000e+00 : f32
    %827 = vector.broadcast %cst_208 : f32 to vector<8x128xf32>
    %828 = arith.maximumf %826, %827 : vector<8x128xf32>
    %c68_209 = arith.constant 68 : index
    %829 = memref.load %arg3[%c68_209] : memref<100xf32, #tpu.memory_space<smem>>
    %830 = vector.broadcast %829 : f32 to vector<8x128xf32>
    %831 = arith.mulf %828, %830 : vector<8x128xf32>
    %832 = arith.addf %820, %831 : vector<8x128xf32>
    %c69 = arith.constant 69 : index
    %833 = memref.load %arg1[%c69] : memref<100xf32, #tpu.memory_space<smem>>
    %834 = vector.broadcast %833 : f32 to vector<8x128xf32>
    %835 = arith.mulf %834, %0 : vector<8x128xf32>
    %c69_210 = arith.constant 69 : index
    %836 = memref.load %arg2[%c69_210] : memref<100xf32, #tpu.memory_space<smem>>
    %837 = vector.broadcast %836 : f32 to vector<8x128xf32>
    %838 = arith.addf %835, %837 : vector<8x128xf32>
    %cst_211 = arith.constant 0.000000e+00 : f32
    %839 = vector.broadcast %cst_211 : f32 to vector<8x128xf32>
    %840 = arith.maximumf %838, %839 : vector<8x128xf32>
    %c69_212 = arith.constant 69 : index
    %841 = memref.load %arg3[%c69_212] : memref<100xf32, #tpu.memory_space<smem>>
    %842 = vector.broadcast %841 : f32 to vector<8x128xf32>
    %843 = arith.mulf %840, %842 : vector<8x128xf32>
    %844 = arith.addf %832, %843 : vector<8x128xf32>
    %c70 = arith.constant 70 : index
    %845 = memref.load %arg1[%c70] : memref<100xf32, #tpu.memory_space<smem>>
    %846 = vector.broadcast %845 : f32 to vector<8x128xf32>
    %847 = arith.mulf %846, %0 : vector<8x128xf32>
    %c70_213 = arith.constant 70 : index
    %848 = memref.load %arg2[%c70_213] : memref<100xf32, #tpu.memory_space<smem>>
    %849 = vector.broadcast %848 : f32 to vector<8x128xf32>
    %850 = arith.addf %847, %849 : vector<8x128xf32>
    %cst_214 = arith.constant 0.000000e+00 : f32
    %851 = vector.broadcast %cst_214 : f32 to vector<8x128xf32>
    %852 = arith.maximumf %850, %851 : vector<8x128xf32>
    %c70_215 = arith.constant 70 : index
    %853 = memref.load %arg3[%c70_215] : memref<100xf32, #tpu.memory_space<smem>>
    %854 = vector.broadcast %853 : f32 to vector<8x128xf32>
    %855 = arith.mulf %852, %854 : vector<8x128xf32>
    %856 = arith.addf %844, %855 : vector<8x128xf32>
    %c71 = arith.constant 71 : index
    %857 = memref.load %arg1[%c71] : memref<100xf32, #tpu.memory_space<smem>>
    %858 = vector.broadcast %857 : f32 to vector<8x128xf32>
    %859 = arith.mulf %858, %0 : vector<8x128xf32>
    %c71_216 = arith.constant 71 : index
    %860 = memref.load %arg2[%c71_216] : memref<100xf32, #tpu.memory_space<smem>>
    %861 = vector.broadcast %860 : f32 to vector<8x128xf32>
    %862 = arith.addf %859, %861 : vector<8x128xf32>
    %cst_217 = arith.constant 0.000000e+00 : f32
    %863 = vector.broadcast %cst_217 : f32 to vector<8x128xf32>
    %864 = arith.maximumf %862, %863 : vector<8x128xf32>
    %c71_218 = arith.constant 71 : index
    %865 = memref.load %arg3[%c71_218] : memref<100xf32, #tpu.memory_space<smem>>
    %866 = vector.broadcast %865 : f32 to vector<8x128xf32>
    %867 = arith.mulf %864, %866 : vector<8x128xf32>
    %868 = arith.addf %856, %867 : vector<8x128xf32>
    %c72 = arith.constant 72 : index
    %869 = memref.load %arg1[%c72] : memref<100xf32, #tpu.memory_space<smem>>
    %870 = vector.broadcast %869 : f32 to vector<8x128xf32>
    %871 = arith.mulf %870, %0 : vector<8x128xf32>
    %c72_219 = arith.constant 72 : index
    %872 = memref.load %arg2[%c72_219] : memref<100xf32, #tpu.memory_space<smem>>
    %873 = vector.broadcast %872 : f32 to vector<8x128xf32>
    %874 = arith.addf %871, %873 : vector<8x128xf32>
    %cst_220 = arith.constant 0.000000e+00 : f32
    %875 = vector.broadcast %cst_220 : f32 to vector<8x128xf32>
    %876 = arith.maximumf %874, %875 : vector<8x128xf32>
    %c72_221 = arith.constant 72 : index
    %877 = memref.load %arg3[%c72_221] : memref<100xf32, #tpu.memory_space<smem>>
    %878 = vector.broadcast %877 : f32 to vector<8x128xf32>
    %879 = arith.mulf %876, %878 : vector<8x128xf32>
    %880 = arith.addf %868, %879 : vector<8x128xf32>
    %c73 = arith.constant 73 : index
    %881 = memref.load %arg1[%c73] : memref<100xf32, #tpu.memory_space<smem>>
    %882 = vector.broadcast %881 : f32 to vector<8x128xf32>
    %883 = arith.mulf %882, %0 : vector<8x128xf32>
    %c73_222 = arith.constant 73 : index
    %884 = memref.load %arg2[%c73_222] : memref<100xf32, #tpu.memory_space<smem>>
    %885 = vector.broadcast %884 : f32 to vector<8x128xf32>
    %886 = arith.addf %883, %885 : vector<8x128xf32>
    %cst_223 = arith.constant 0.000000e+00 : f32
    %887 = vector.broadcast %cst_223 : f32 to vector<8x128xf32>
    %888 = arith.maximumf %886, %887 : vector<8x128xf32>
    %c73_224 = arith.constant 73 : index
    %889 = memref.load %arg3[%c73_224] : memref<100xf32, #tpu.memory_space<smem>>
    %890 = vector.broadcast %889 : f32 to vector<8x128xf32>
    %891 = arith.mulf %888, %890 : vector<8x128xf32>
    %892 = arith.addf %880, %891 : vector<8x128xf32>
    %c74 = arith.constant 74 : index
    %893 = memref.load %arg1[%c74] : memref<100xf32, #tpu.memory_space<smem>>
    %894 = vector.broadcast %893 : f32 to vector<8x128xf32>
    %895 = arith.mulf %894, %0 : vector<8x128xf32>
    %c74_225 = arith.constant 74 : index
    %896 = memref.load %arg2[%c74_225] : memref<100xf32, #tpu.memory_space<smem>>
    %897 = vector.broadcast %896 : f32 to vector<8x128xf32>
    %898 = arith.addf %895, %897 : vector<8x128xf32>
    %cst_226 = arith.constant 0.000000e+00 : f32
    %899 = vector.broadcast %cst_226 : f32 to vector<8x128xf32>
    %900 = arith.maximumf %898, %899 : vector<8x128xf32>
    %c74_227 = arith.constant 74 : index
    %901 = memref.load %arg3[%c74_227] : memref<100xf32, #tpu.memory_space<smem>>
    %902 = vector.broadcast %901 : f32 to vector<8x128xf32>
    %903 = arith.mulf %900, %902 : vector<8x128xf32>
    %904 = arith.addf %892, %903 : vector<8x128xf32>
    %c75 = arith.constant 75 : index
    %905 = memref.load %arg1[%c75] : memref<100xf32, #tpu.memory_space<smem>>
    %906 = vector.broadcast %905 : f32 to vector<8x128xf32>
    %907 = arith.mulf %906, %0 : vector<8x128xf32>
    %c75_228 = arith.constant 75 : index
    %908 = memref.load %arg2[%c75_228] : memref<100xf32, #tpu.memory_space<smem>>
    %909 = vector.broadcast %908 : f32 to vector<8x128xf32>
    %910 = arith.addf %907, %909 : vector<8x128xf32>
    %cst_229 = arith.constant 0.000000e+00 : f32
    %911 = vector.broadcast %cst_229 : f32 to vector<8x128xf32>
    %912 = arith.maximumf %910, %911 : vector<8x128xf32>
    %c75_230 = arith.constant 75 : index
    %913 = memref.load %arg3[%c75_230] : memref<100xf32, #tpu.memory_space<smem>>
    %914 = vector.broadcast %913 : f32 to vector<8x128xf32>
    %915 = arith.mulf %912, %914 : vector<8x128xf32>
    %916 = arith.addf %904, %915 : vector<8x128xf32>
    %c76 = arith.constant 76 : index
    %917 = memref.load %arg1[%c76] : memref<100xf32, #tpu.memory_space<smem>>
    %918 = vector.broadcast %917 : f32 to vector<8x128xf32>
    %919 = arith.mulf %918, %0 : vector<8x128xf32>
    %c76_231 = arith.constant 76 : index
    %920 = memref.load %arg2[%c76_231] : memref<100xf32, #tpu.memory_space<smem>>
    %921 = vector.broadcast %920 : f32 to vector<8x128xf32>
    %922 = arith.addf %919, %921 : vector<8x128xf32>
    %cst_232 = arith.constant 0.000000e+00 : f32
    %923 = vector.broadcast %cst_232 : f32 to vector<8x128xf32>
    %924 = arith.maximumf %922, %923 : vector<8x128xf32>
    %c76_233 = arith.constant 76 : index
    %925 = memref.load %arg3[%c76_233] : memref<100xf32, #tpu.memory_space<smem>>
    %926 = vector.broadcast %925 : f32 to vector<8x128xf32>
    %927 = arith.mulf %924, %926 : vector<8x128xf32>
    %928 = arith.addf %916, %927 : vector<8x128xf32>
    %c77 = arith.constant 77 : index
    %929 = memref.load %arg1[%c77] : memref<100xf32, #tpu.memory_space<smem>>
    %930 = vector.broadcast %929 : f32 to vector<8x128xf32>
    %931 = arith.mulf %930, %0 : vector<8x128xf32>
    %c77_234 = arith.constant 77 : index
    %932 = memref.load %arg2[%c77_234] : memref<100xf32, #tpu.memory_space<smem>>
    %933 = vector.broadcast %932 : f32 to vector<8x128xf32>
    %934 = arith.addf %931, %933 : vector<8x128xf32>
    %cst_235 = arith.constant 0.000000e+00 : f32
    %935 = vector.broadcast %cst_235 : f32 to vector<8x128xf32>
    %936 = arith.maximumf %934, %935 : vector<8x128xf32>
    %c77_236 = arith.constant 77 : index
    %937 = memref.load %arg3[%c77_236] : memref<100xf32, #tpu.memory_space<smem>>
    %938 = vector.broadcast %937 : f32 to vector<8x128xf32>
    %939 = arith.mulf %936, %938 : vector<8x128xf32>
    %940 = arith.addf %928, %939 : vector<8x128xf32>
    %c78 = arith.constant 78 : index
    %941 = memref.load %arg1[%c78] : memref<100xf32, #tpu.memory_space<smem>>
    %942 = vector.broadcast %941 : f32 to vector<8x128xf32>
    %943 = arith.mulf %942, %0 : vector<8x128xf32>
    %c78_237 = arith.constant 78 : index
    %944 = memref.load %arg2[%c78_237] : memref<100xf32, #tpu.memory_space<smem>>
    %945 = vector.broadcast %944 : f32 to vector<8x128xf32>
    %946 = arith.addf %943, %945 : vector<8x128xf32>
    %cst_238 = arith.constant 0.000000e+00 : f32
    %947 = vector.broadcast %cst_238 : f32 to vector<8x128xf32>
    %948 = arith.maximumf %946, %947 : vector<8x128xf32>
    %c78_239 = arith.constant 78 : index
    %949 = memref.load %arg3[%c78_239] : memref<100xf32, #tpu.memory_space<smem>>
    %950 = vector.broadcast %949 : f32 to vector<8x128xf32>
    %951 = arith.mulf %948, %950 : vector<8x128xf32>
    %952 = arith.addf %940, %951 : vector<8x128xf32>
    %c79 = arith.constant 79 : index
    %953 = memref.load %arg1[%c79] : memref<100xf32, #tpu.memory_space<smem>>
    %954 = vector.broadcast %953 : f32 to vector<8x128xf32>
    %955 = arith.mulf %954, %0 : vector<8x128xf32>
    %c79_240 = arith.constant 79 : index
    %956 = memref.load %arg2[%c79_240] : memref<100xf32, #tpu.memory_space<smem>>
    %957 = vector.broadcast %956 : f32 to vector<8x128xf32>
    %958 = arith.addf %955, %957 : vector<8x128xf32>
    %cst_241 = arith.constant 0.000000e+00 : f32
    %959 = vector.broadcast %cst_241 : f32 to vector<8x128xf32>
    %960 = arith.maximumf %958, %959 : vector<8x128xf32>
    %c79_242 = arith.constant 79 : index
    %961 = memref.load %arg3[%c79_242] : memref<100xf32, #tpu.memory_space<smem>>
    %962 = vector.broadcast %961 : f32 to vector<8x128xf32>
    %963 = arith.mulf %960, %962 : vector<8x128xf32>
    %964 = arith.addf %952, %963 : vector<8x128xf32>
    %c80 = arith.constant 80 : index
    %965 = memref.load %arg1[%c80] : memref<100xf32, #tpu.memory_space<smem>>
    %966 = vector.broadcast %965 : f32 to vector<8x128xf32>
    %967 = arith.mulf %966, %0 : vector<8x128xf32>
    %c80_243 = arith.constant 80 : index
    %968 = memref.load %arg2[%c80_243] : memref<100xf32, #tpu.memory_space<smem>>
    %969 = vector.broadcast %968 : f32 to vector<8x128xf32>
    %970 = arith.addf %967, %969 : vector<8x128xf32>
    %cst_244 = arith.constant 0.000000e+00 : f32
    %971 = vector.broadcast %cst_244 : f32 to vector<8x128xf32>
    %972 = arith.maximumf %970, %971 : vector<8x128xf32>
    %c80_245 = arith.constant 80 : index
    %973 = memref.load %arg3[%c80_245] : memref<100xf32, #tpu.memory_space<smem>>
    %974 = vector.broadcast %973 : f32 to vector<8x128xf32>
    %975 = arith.mulf %972, %974 : vector<8x128xf32>
    %976 = arith.addf %964, %975 : vector<8x128xf32>
    %c81 = arith.constant 81 : index
    %977 = memref.load %arg1[%c81] : memref<100xf32, #tpu.memory_space<smem>>
    %978 = vector.broadcast %977 : f32 to vector<8x128xf32>
    %979 = arith.mulf %978, %0 : vector<8x128xf32>
    %c81_246 = arith.constant 81 : index
    %980 = memref.load %arg2[%c81_246] : memref<100xf32, #tpu.memory_space<smem>>
    %981 = vector.broadcast %980 : f32 to vector<8x128xf32>
    %982 = arith.addf %979, %981 : vector<8x128xf32>
    %cst_247 = arith.constant 0.000000e+00 : f32
    %983 = vector.broadcast %cst_247 : f32 to vector<8x128xf32>
    %984 = arith.maximumf %982, %983 : vector<8x128xf32>
    %c81_248 = arith.constant 81 : index
    %985 = memref.load %arg3[%c81_248] : memref<100xf32, #tpu.memory_space<smem>>
    %986 = vector.broadcast %985 : f32 to vector<8x128xf32>
    %987 = arith.mulf %984, %986 : vector<8x128xf32>
    %988 = arith.addf %976, %987 : vector<8x128xf32>
    %c82 = arith.constant 82 : index
    %989 = memref.load %arg1[%c82] : memref<100xf32, #tpu.memory_space<smem>>
    %990 = vector.broadcast %989 : f32 to vector<8x128xf32>
    %991 = arith.mulf %990, %0 : vector<8x128xf32>
    %c82_249 = arith.constant 82 : index
    %992 = memref.load %arg2[%c82_249] : memref<100xf32, #tpu.memory_space<smem>>
    %993 = vector.broadcast %992 : f32 to vector<8x128xf32>
    %994 = arith.addf %991, %993 : vector<8x128xf32>
    %cst_250 = arith.constant 0.000000e+00 : f32
    %995 = vector.broadcast %cst_250 : f32 to vector<8x128xf32>
    %996 = arith.maximumf %994, %995 : vector<8x128xf32>
    %c82_251 = arith.constant 82 : index
    %997 = memref.load %arg3[%c82_251] : memref<100xf32, #tpu.memory_space<smem>>
    %998 = vector.broadcast %997 : f32 to vector<8x128xf32>
    %999 = arith.mulf %996, %998 : vector<8x128xf32>
    %1000 = arith.addf %988, %999 : vector<8x128xf32>
    %c83 = arith.constant 83 : index
    %1001 = memref.load %arg1[%c83] : memref<100xf32, #tpu.memory_space<smem>>
    %1002 = vector.broadcast %1001 : f32 to vector<8x128xf32>
    %1003 = arith.mulf %1002, %0 : vector<8x128xf32>
    %c83_252 = arith.constant 83 : index
    %1004 = memref.load %arg2[%c83_252] : memref<100xf32, #tpu.memory_space<smem>>
    %1005 = vector.broadcast %1004 : f32 to vector<8x128xf32>
    %1006 = arith.addf %1003, %1005 : vector<8x128xf32>
    %cst_253 = arith.constant 0.000000e+00 : f32
    %1007 = vector.broadcast %cst_253 : f32 to vector<8x128xf32>
    %1008 = arith.maximumf %1006, %1007 : vector<8x128xf32>
    %c83_254 = arith.constant 83 : index
    %1009 = memref.load %arg3[%c83_254] : memref<100xf32, #tpu.memory_space<smem>>
    %1010 = vector.broadcast %1009 : f32 to vector<8x128xf32>
    %1011 = arith.mulf %1008, %1010 : vector<8x128xf32>
    %1012 = arith.addf %1000, %1011 : vector<8x128xf32>
    %c84 = arith.constant 84 : index
    %1013 = memref.load %arg1[%c84] : memref<100xf32, #tpu.memory_space<smem>>
    %1014 = vector.broadcast %1013 : f32 to vector<8x128xf32>
    %1015 = arith.mulf %1014, %0 : vector<8x128xf32>
    %c84_255 = arith.constant 84 : index
    %1016 = memref.load %arg2[%c84_255] : memref<100xf32, #tpu.memory_space<smem>>
    %1017 = vector.broadcast %1016 : f32 to vector<8x128xf32>
    %1018 = arith.addf %1015, %1017 : vector<8x128xf32>
    %cst_256 = arith.constant 0.000000e+00 : f32
    %1019 = vector.broadcast %cst_256 : f32 to vector<8x128xf32>
    %1020 = arith.maximumf %1018, %1019 : vector<8x128xf32>
    %c84_257 = arith.constant 84 : index
    %1021 = memref.load %arg3[%c84_257] : memref<100xf32, #tpu.memory_space<smem>>
    %1022 = vector.broadcast %1021 : f32 to vector<8x128xf32>
    %1023 = arith.mulf %1020, %1022 : vector<8x128xf32>
    %1024 = arith.addf %1012, %1023 : vector<8x128xf32>
    %c85 = arith.constant 85 : index
    %1025 = memref.load %arg1[%c85] : memref<100xf32, #tpu.memory_space<smem>>
    %1026 = vector.broadcast %1025 : f32 to vector<8x128xf32>
    %1027 = arith.mulf %1026, %0 : vector<8x128xf32>
    %c85_258 = arith.constant 85 : index
    %1028 = memref.load %arg2[%c85_258] : memref<100xf32, #tpu.memory_space<smem>>
    %1029 = vector.broadcast %1028 : f32 to vector<8x128xf32>
    %1030 = arith.addf %1027, %1029 : vector<8x128xf32>
    %cst_259 = arith.constant 0.000000e+00 : f32
    %1031 = vector.broadcast %cst_259 : f32 to vector<8x128xf32>
    %1032 = arith.maximumf %1030, %1031 : vector<8x128xf32>
    %c85_260 = arith.constant 85 : index
    %1033 = memref.load %arg3[%c85_260] : memref<100xf32, #tpu.memory_space<smem>>
    %1034 = vector.broadcast %1033 : f32 to vector<8x128xf32>
    %1035 = arith.mulf %1032, %1034 : vector<8x128xf32>
    %1036 = arith.addf %1024, %1035 : vector<8x128xf32>
    %c86 = arith.constant 86 : index
    %1037 = memref.load %arg1[%c86] : memref<100xf32, #tpu.memory_space<smem>>
    %1038 = vector.broadcast %1037 : f32 to vector<8x128xf32>
    %1039 = arith.mulf %1038, %0 : vector<8x128xf32>
    %c86_261 = arith.constant 86 : index
    %1040 = memref.load %arg2[%c86_261] : memref<100xf32, #tpu.memory_space<smem>>
    %1041 = vector.broadcast %1040 : f32 to vector<8x128xf32>
    %1042 = arith.addf %1039, %1041 : vector<8x128xf32>
    %cst_262 = arith.constant 0.000000e+00 : f32
    %1043 = vector.broadcast %cst_262 : f32 to vector<8x128xf32>
    %1044 = arith.maximumf %1042, %1043 : vector<8x128xf32>
    %c86_263 = arith.constant 86 : index
    %1045 = memref.load %arg3[%c86_263] : memref<100xf32, #tpu.memory_space<smem>>
    %1046 = vector.broadcast %1045 : f32 to vector<8x128xf32>
    %1047 = arith.mulf %1044, %1046 : vector<8x128xf32>
    %1048 = arith.addf %1036, %1047 : vector<8x128xf32>
    %c87 = arith.constant 87 : index
    %1049 = memref.load %arg1[%c87] : memref<100xf32, #tpu.memory_space<smem>>
    %1050 = vector.broadcast %1049 : f32 to vector<8x128xf32>
    %1051 = arith.mulf %1050, %0 : vector<8x128xf32>
    %c87_264 = arith.constant 87 : index
    %1052 = memref.load %arg2[%c87_264] : memref<100xf32, #tpu.memory_space<smem>>
    %1053 = vector.broadcast %1052 : f32 to vector<8x128xf32>
    %1054 = arith.addf %1051, %1053 : vector<8x128xf32>
    %cst_265 = arith.constant 0.000000e+00 : f32
    %1055 = vector.broadcast %cst_265 : f32 to vector<8x128xf32>
    %1056 = arith.maximumf %1054, %1055 : vector<8x128xf32>
    %c87_266 = arith.constant 87 : index
    %1057 = memref.load %arg3[%c87_266] : memref<100xf32, #tpu.memory_space<smem>>
    %1058 = vector.broadcast %1057 : f32 to vector<8x128xf32>
    %1059 = arith.mulf %1056, %1058 : vector<8x128xf32>
    %1060 = arith.addf %1048, %1059 : vector<8x128xf32>
    %c88 = arith.constant 88 : index
    %1061 = memref.load %arg1[%c88] : memref<100xf32, #tpu.memory_space<smem>>
    %1062 = vector.broadcast %1061 : f32 to vector<8x128xf32>
    %1063 = arith.mulf %1062, %0 : vector<8x128xf32>
    %c88_267 = arith.constant 88 : index
    %1064 = memref.load %arg2[%c88_267] : memref<100xf32, #tpu.memory_space<smem>>
    %1065 = vector.broadcast %1064 : f32 to vector<8x128xf32>
    %1066 = arith.addf %1063, %1065 : vector<8x128xf32>
    %cst_268 = arith.constant 0.000000e+00 : f32
    %1067 = vector.broadcast %cst_268 : f32 to vector<8x128xf32>
    %1068 = arith.maximumf %1066, %1067 : vector<8x128xf32>
    %c88_269 = arith.constant 88 : index
    %1069 = memref.load %arg3[%c88_269] : memref<100xf32, #tpu.memory_space<smem>>
    %1070 = vector.broadcast %1069 : f32 to vector<8x128xf32>
    %1071 = arith.mulf %1068, %1070 : vector<8x128xf32>
    %1072 = arith.addf %1060, %1071 : vector<8x128xf32>
    %c89 = arith.constant 89 : index
    %1073 = memref.load %arg1[%c89] : memref<100xf32, #tpu.memory_space<smem>>
    %1074 = vector.broadcast %1073 : f32 to vector<8x128xf32>
    %1075 = arith.mulf %1074, %0 : vector<8x128xf32>
    %c89_270 = arith.constant 89 : index
    %1076 = memref.load %arg2[%c89_270] : memref<100xf32, #tpu.memory_space<smem>>
    %1077 = vector.broadcast %1076 : f32 to vector<8x128xf32>
    %1078 = arith.addf %1075, %1077 : vector<8x128xf32>
    %cst_271 = arith.constant 0.000000e+00 : f32
    %1079 = vector.broadcast %cst_271 : f32 to vector<8x128xf32>
    %1080 = arith.maximumf %1078, %1079 : vector<8x128xf32>
    %c89_272 = arith.constant 89 : index
    %1081 = memref.load %arg3[%c89_272] : memref<100xf32, #tpu.memory_space<smem>>
    %1082 = vector.broadcast %1081 : f32 to vector<8x128xf32>
    %1083 = arith.mulf %1080, %1082 : vector<8x128xf32>
    %1084 = arith.addf %1072, %1083 : vector<8x128xf32>
    %c90 = arith.constant 90 : index
    %1085 = memref.load %arg1[%c90] : memref<100xf32, #tpu.memory_space<smem>>
    %1086 = vector.broadcast %1085 : f32 to vector<8x128xf32>
    %1087 = arith.mulf %1086, %0 : vector<8x128xf32>
    %c90_273 = arith.constant 90 : index
    %1088 = memref.load %arg2[%c90_273] : memref<100xf32, #tpu.memory_space<smem>>
    %1089 = vector.broadcast %1088 : f32 to vector<8x128xf32>
    %1090 = arith.addf %1087, %1089 : vector<8x128xf32>
    %cst_274 = arith.constant 0.000000e+00 : f32
    %1091 = vector.broadcast %cst_274 : f32 to vector<8x128xf32>
    %1092 = arith.maximumf %1090, %1091 : vector<8x128xf32>
    %c90_275 = arith.constant 90 : index
    %1093 = memref.load %arg3[%c90_275] : memref<100xf32, #tpu.memory_space<smem>>
    %1094 = vector.broadcast %1093 : f32 to vector<8x128xf32>
    %1095 = arith.mulf %1092, %1094 : vector<8x128xf32>
    %1096 = arith.addf %1084, %1095 : vector<8x128xf32>
    %c91 = arith.constant 91 : index
    %1097 = memref.load %arg1[%c91] : memref<100xf32, #tpu.memory_space<smem>>
    %1098 = vector.broadcast %1097 : f32 to vector<8x128xf32>
    %1099 = arith.mulf %1098, %0 : vector<8x128xf32>
    %c91_276 = arith.constant 91 : index
    %1100 = memref.load %arg2[%c91_276] : memref<100xf32, #tpu.memory_space<smem>>
    %1101 = vector.broadcast %1100 : f32 to vector<8x128xf32>
    %1102 = arith.addf %1099, %1101 : vector<8x128xf32>
    %cst_277 = arith.constant 0.000000e+00 : f32
    %1103 = vector.broadcast %cst_277 : f32 to vector<8x128xf32>
    %1104 = arith.maximumf %1102, %1103 : vector<8x128xf32>
    %c91_278 = arith.constant 91 : index
    %1105 = memref.load %arg3[%c91_278] : memref<100xf32, #tpu.memory_space<smem>>
    %1106 = vector.broadcast %1105 : f32 to vector<8x128xf32>
    %1107 = arith.mulf %1104, %1106 : vector<8x128xf32>
    %1108 = arith.addf %1096, %1107 : vector<8x128xf32>
    %c92 = arith.constant 92 : index
    %1109 = memref.load %arg1[%c92] : memref<100xf32, #tpu.memory_space<smem>>
    %1110 = vector.broadcast %1109 : f32 to vector<8x128xf32>
    %1111 = arith.mulf %1110, %0 : vector<8x128xf32>
    %c92_279 = arith.constant 92 : index
    %1112 = memref.load %arg2[%c92_279] : memref<100xf32, #tpu.memory_space<smem>>
    %1113 = vector.broadcast %1112 : f32 to vector<8x128xf32>
    %1114 = arith.addf %1111, %1113 : vector<8x128xf32>
    %cst_280 = arith.constant 0.000000e+00 : f32
    %1115 = vector.broadcast %cst_280 : f32 to vector<8x128xf32>
    %1116 = arith.maximumf %1114, %1115 : vector<8x128xf32>
    %c92_281 = arith.constant 92 : index
    %1117 = memref.load %arg3[%c92_281] : memref<100xf32, #tpu.memory_space<smem>>
    %1118 = vector.broadcast %1117 : f32 to vector<8x128xf32>
    %1119 = arith.mulf %1116, %1118 : vector<8x128xf32>
    %1120 = arith.addf %1108, %1119 : vector<8x128xf32>
    %c93 = arith.constant 93 : index
    %1121 = memref.load %arg1[%c93] : memref<100xf32, #tpu.memory_space<smem>>
    %1122 = vector.broadcast %1121 : f32 to vector<8x128xf32>
    %1123 = arith.mulf %1122, %0 : vector<8x128xf32>
    %c93_282 = arith.constant 93 : index
    %1124 = memref.load %arg2[%c93_282] : memref<100xf32, #tpu.memory_space<smem>>
    %1125 = vector.broadcast %1124 : f32 to vector<8x128xf32>
    %1126 = arith.addf %1123, %1125 : vector<8x128xf32>
    %cst_283 = arith.constant 0.000000e+00 : f32
    %1127 = vector.broadcast %cst_283 : f32 to vector<8x128xf32>
    %1128 = arith.maximumf %1126, %1127 : vector<8x128xf32>
    %c93_284 = arith.constant 93 : index
    %1129 = memref.load %arg3[%c93_284] : memref<100xf32, #tpu.memory_space<smem>>
    %1130 = vector.broadcast %1129 : f32 to vector<8x128xf32>
    %1131 = arith.mulf %1128, %1130 : vector<8x128xf32>
    %1132 = arith.addf %1120, %1131 : vector<8x128xf32>
    %c94 = arith.constant 94 : index
    %1133 = memref.load %arg1[%c94] : memref<100xf32, #tpu.memory_space<smem>>
    %1134 = vector.broadcast %1133 : f32 to vector<8x128xf32>
    %1135 = arith.mulf %1134, %0 : vector<8x128xf32>
    %c94_285 = arith.constant 94 : index
    %1136 = memref.load %arg2[%c94_285] : memref<100xf32, #tpu.memory_space<smem>>
    %1137 = vector.broadcast %1136 : f32 to vector<8x128xf32>
    %1138 = arith.addf %1135, %1137 : vector<8x128xf32>
    %cst_286 = arith.constant 0.000000e+00 : f32
    %1139 = vector.broadcast %cst_286 : f32 to vector<8x128xf32>
    %1140 = arith.maximumf %1138, %1139 : vector<8x128xf32>
    %c94_287 = arith.constant 94 : index
    %1141 = memref.load %arg3[%c94_287] : memref<100xf32, #tpu.memory_space<smem>>
    %1142 = vector.broadcast %1141 : f32 to vector<8x128xf32>
    %1143 = arith.mulf %1140, %1142 : vector<8x128xf32>
    %1144 = arith.addf %1132, %1143 : vector<8x128xf32>
    %c95 = arith.constant 95 : index
    %1145 = memref.load %arg1[%c95] : memref<100xf32, #tpu.memory_space<smem>>
    %1146 = vector.broadcast %1145 : f32 to vector<8x128xf32>
    %1147 = arith.mulf %1146, %0 : vector<8x128xf32>
    %c95_288 = arith.constant 95 : index
    %1148 = memref.load %arg2[%c95_288] : memref<100xf32, #tpu.memory_space<smem>>
    %1149 = vector.broadcast %1148 : f32 to vector<8x128xf32>
    %1150 = arith.addf %1147, %1149 : vector<8x128xf32>
    %cst_289 = arith.constant 0.000000e+00 : f32
    %1151 = vector.broadcast %cst_289 : f32 to vector<8x128xf32>
    %1152 = arith.maximumf %1150, %1151 : vector<8x128xf32>
    %c95_290 = arith.constant 95 : index
    %1153 = memref.load %arg3[%c95_290] : memref<100xf32, #tpu.memory_space<smem>>
    %1154 = vector.broadcast %1153 : f32 to vector<8x128xf32>
    %1155 = arith.mulf %1152, %1154 : vector<8x128xf32>
    %1156 = arith.addf %1144, %1155 : vector<8x128xf32>
    %c96 = arith.constant 96 : index
    %1157 = memref.load %arg1[%c96] : memref<100xf32, #tpu.memory_space<smem>>
    %1158 = vector.broadcast %1157 : f32 to vector<8x128xf32>
    %1159 = arith.mulf %1158, %0 : vector<8x128xf32>
    %c96_291 = arith.constant 96 : index
    %1160 = memref.load %arg2[%c96_291] : memref<100xf32, #tpu.memory_space<smem>>
    %1161 = vector.broadcast %1160 : f32 to vector<8x128xf32>
    %1162 = arith.addf %1159, %1161 : vector<8x128xf32>
    %cst_292 = arith.constant 0.000000e+00 : f32
    %1163 = vector.broadcast %cst_292 : f32 to vector<8x128xf32>
    %1164 = arith.maximumf %1162, %1163 : vector<8x128xf32>
    %c96_293 = arith.constant 96 : index
    %1165 = memref.load %arg3[%c96_293] : memref<100xf32, #tpu.memory_space<smem>>
    %1166 = vector.broadcast %1165 : f32 to vector<8x128xf32>
    %1167 = arith.mulf %1164, %1166 : vector<8x128xf32>
    %1168 = arith.addf %1156, %1167 : vector<8x128xf32>
    %c97 = arith.constant 97 : index
    %1169 = memref.load %arg1[%c97] : memref<100xf32, #tpu.memory_space<smem>>
    %1170 = vector.broadcast %1169 : f32 to vector<8x128xf32>
    %1171 = arith.mulf %1170, %0 : vector<8x128xf32>
    %c97_294 = arith.constant 97 : index
    %1172 = memref.load %arg2[%c97_294] : memref<100xf32, #tpu.memory_space<smem>>
    %1173 = vector.broadcast %1172 : f32 to vector<8x128xf32>
    %1174 = arith.addf %1171, %1173 : vector<8x128xf32>
    %cst_295 = arith.constant 0.000000e+00 : f32
    %1175 = vector.broadcast %cst_295 : f32 to vector<8x128xf32>
    %1176 = arith.maximumf %1174, %1175 : vector<8x128xf32>
    %c97_296 = arith.constant 97 : index
    %1177 = memref.load %arg3[%c97_296] : memref<100xf32, #tpu.memory_space<smem>>
    %1178 = vector.broadcast %1177 : f32 to vector<8x128xf32>
    %1179 = arith.mulf %1176, %1178 : vector<8x128xf32>
    %1180 = arith.addf %1168, %1179 : vector<8x128xf32>
    %c98 = arith.constant 98 : index
    %1181 = memref.load %arg1[%c98] : memref<100xf32, #tpu.memory_space<smem>>
    %1182 = vector.broadcast %1181 : f32 to vector<8x128xf32>
    %1183 = arith.mulf %1182, %0 : vector<8x128xf32>
    %c98_297 = arith.constant 98 : index
    %1184 = memref.load %arg2[%c98_297] : memref<100xf32, #tpu.memory_space<smem>>
    %1185 = vector.broadcast %1184 : f32 to vector<8x128xf32>
    %1186 = arith.addf %1183, %1185 : vector<8x128xf32>
    %cst_298 = arith.constant 0.000000e+00 : f32
    %1187 = vector.broadcast %cst_298 : f32 to vector<8x128xf32>
    %1188 = arith.maximumf %1186, %1187 : vector<8x128xf32>
    %c98_299 = arith.constant 98 : index
    %1189 = memref.load %arg3[%c98_299] : memref<100xf32, #tpu.memory_space<smem>>
    %1190 = vector.broadcast %1189 : f32 to vector<8x128xf32>
    %1191 = arith.mulf %1188, %1190 : vector<8x128xf32>
    %1192 = arith.addf %1180, %1191 : vector<8x128xf32>
    %c99 = arith.constant 99 : index
    %1193 = memref.load %arg1[%c99] : memref<100xf32, #tpu.memory_space<smem>>
    %1194 = vector.broadcast %1193 : f32 to vector<8x128xf32>
    %1195 = arith.mulf %1194, %0 : vector<8x128xf32>
    %c99_300 = arith.constant 99 : index
    %1196 = memref.load %arg2[%c99_300] : memref<100xf32, #tpu.memory_space<smem>>
    %1197 = vector.broadcast %1196 : f32 to vector<8x128xf32>
    %1198 = arith.addf %1195, %1197 : vector<8x128xf32>
    %cst_301 = arith.constant 0.000000e+00 : f32
    %1199 = vector.broadcast %cst_301 : f32 to vector<8x128xf32>
    %1200 = arith.maximumf %1198, %1199 : vector<8x128xf32>
    %c99_302 = arith.constant 99 : index
    %1201 = memref.load %arg3[%c99_302] : memref<100xf32, #tpu.memory_space<smem>>
    %1202 = vector.broadcast %1201 : f32 to vector<8x128xf32>
    %1203 = arith.mulf %1200, %1202 : vector<8x128xf32>
    %1204 = arith.addf %1192, %1203 : vector<8x128xf32>
    %c0_303 = arith.constant 0 : index
    %c0_304 = arith.constant 0 : index
    %1205 = vector.load %arg6[%c0_303, %c0_304] : memref<8x128xf32, #tpu.memory_space<vmem>>, vector<8x128xf32>
    tpu.vector_store %arg6[%c0_303, %c0_304], %1204 {strides = array<i32>} : memref<8x128xf32, #tpu.memory_space<vmem>>, vector<8x128xf32>,
    return
  }
  func.func @transform_0(%arg0: i32) -> i32 {
    %c0_i32 = arith.constant 0 : i32
    %c0_i32_0 = arith.constant 0 : i32
    return %c0_i32 : i32
  }
  func.func @transform_1(%arg0: i32) -> i32 {
    %c0_i32 = arith.constant 0 : i32
    %c0_i32_0 = arith.constant 0 : i32
    return %c0_i32 : i32
  }
  func.func @transform_2(%arg0: i32) -> i32 {
    %c0_i32 = arith.constant 0 : i32
    %c0_i32_0 = arith.constant 0 : i32
    return %c0_i32 : i32
  }
  func.func @transform_3(%arg0: i32) -> i32 {
    %c0_i32 = arith.constant 0 : i32
    %c0_i32_0 = arith.constant 0 : i32
    return %c0_i32 : i32
  }
  func.func @transform_4(%arg0: i32) -> (i32, i32) {
    %c0_i32 = arith.constant 0 : i32
    %c0_i32_0 = arith.constant 0 : i32
    return %arg0, %c0_i32 : i32, i32
  }
  func.func @transform_5(%arg0: i32) -> (i32, i32) {
    %c0_i32 = arith.constant 0 : i32
    %c0_i32_0 = arith.constant 0 : i32
    return %arg0, %c0_i32 : i32, i32
  }
}

</mosaic_0001>

<llo_original>
// kernel: squarenet_forward.1
$region0: #{squarenet_forward.1}
  #allocation0 [shape = 'u32[]', space=smem, size = 0x4, offset = 0x4, fixed_abs, tag = 'smem constant byte address 0x4 - core index']
  #allocation1 [shape = 'u32[72,128]{1,0:T(1,128)}', space=vmem, size = 0x9000, scoped, tag = 'internal scratch']
  #allocation2 [shape = 'f32[1]{0:T(128)S(6)}', space=smem, size = 0x200, scoped, tag = 'scoped memory for squarenet_forward.1']
  %s0 = inlined_call_operand.vmem [shape: f32[100], index: 0, kind: input, shape index: {}]
  %s1 = inlined_call_operand.vmem [shape: f32[100], index: 1, kind: input, shape index: {}]
  %s2 = inlined_call_operand.vmem [shape: f32[100], index: 2, kind: input, shape index: {}]
  %s3 = inlined_call_operand.<no memory space> [shape: f32[1], index: 3, kind: input, shape index: {}]
  %s4 = inlined_call_operand.vmem [shape: f32[8,128], index: 4, kind: input, shape index: {}]
  %s5 = inlined_call_operand.vmem [shape: f32[8,128], index: 5, kind: output, shape index: {}]
  %s6 = sld [smem:[#allocation0]]
  $region42: #{squarenet_forward.1} parent=0
    _
  %s8 = ssub.s32 1, %s6
  %s9 = scalar_select 0, %s8, %s6
  %10 = sst [smem:[#allocation2]] %s3
  $region1: #{squarenet_forward.1} parent=0
    #allocation3 [shape = 'u8[512]{0}', space=smem, size = 0x200, scoped, tag = 'input window, operand 0, single buffered']
    #allocation4 [shape = 's32[1]{0}', space=sflag, size = 0x4, scoped, tag = 'scoped memory for squarenet_forward.1']
    #allocation5 [shape = 'u8[512]{0}', space=smem, size = 0x200, scoped, tag = 'input window, operand 1, single buffered']
    #allocation6 [shape = 's32[1]{0}', space=sflag, size = 0x4, scoped, tag = 'scoped memory for squarenet_forward.1']
    #allocation7 [shape = 'u8[512]{0}', space=smem, size = 0x200, scoped, tag = 'input window, operand 2, single buffered']
    %11 = vsyncpa [#allocation4], 0
    %12 = vsyncpa [#allocation6], 0
    // Predicated region
    $region2: #{squarenet_forward.1} parent=1 // pred_check
      _
    $region3: #{squarenet_forward.1} parent=1 // pred_check_branch
      %14 = sbr.rel (0) target = $region5
    $region4: #{squarenet_forward.1} parent=1 // pred_region
      %16 = vsyncadd [#allocation4], 0
      %s18 = sshll.u32 %s0, 4
      %s19 = int_to_ptr.vmem [resolvable:$true] %s18
      %21 = dma.vmem_to_smem %s19, 16, [#allocation3], [#allocation4]
    $region5: #{squarenet_forward.1} parent=1 // pred_fallthru
      _
    // Predicated region
    $region6: #{squarenet_forward.1} parent=1 // pred_check
      _
    $region7: #{squarenet_forward.1} parent=1 // pred_check_branch
      %23 = sbr.rel (0) target = $region9
    $region8: #{squarenet_forward.1} parent=1 // pred_region
      %25 = vsyncadd [#allocation6], 0
      %s27 = sshll.u32 %s1, 4
      %s28 = int_to_ptr.vmem [resolvable:$true] %s27
      %30 = dma.vmem_to_smem %s28, 16, [#allocation5], [#allocation6]
    $region9: #{squarenet_forward.1} parent=1 // pred_fallthru
      _
    // Predicated region
    $region10: #{squarenet_forward.1} parent=1 // pred_check
      _
    $region11: #{squarenet_forward.1} parent=1 // pred_check_branch
      %32 = sbr.rel (0) target = $region13
    $region12: #{squarenet_forward.1} parent=1 // pred_region
      %34 = vsyncadd [#allocation6], 0
      %s36 = sshll.u32 %s2, 4
      %s37 = int_to_ptr.vmem [resolvable:$true] %s36
      %39 = dma.vmem_to_smem %s37, 16, [#allocation7], [#allocation6]
    $region13: #{squarenet_forward.1} parent=1 // pred_fallthru
      _
    // Predicated region
    $region14: #{squarenet_forward.1} parent=1 // pred_check
      _
    $region15: #{squarenet_forward.1} parent=1 // pred_check_branch
      %41 = sbr.rel (0) target = $region17
    $region16: #{squarenet_forward.1} parent=1 // pred_region
      _
    $region17: #{squarenet_forward.1} parent=1 // pred_fallthru
      _
    // Predicated region
    $region18: #{squarenet_forward.1} parent=1 // pred_check
      _
    $region19: #{squarenet_forward.1} parent=1 // pred_check_branch
      %43 = sbr.rel (0) target = $region21
    $region20: #{squarenet_forward.1} parent=1 // pred_region
      _
    $region21: #{squarenet_forward.1} parent=1 // pred_fallthru
      _
    // Predicated region
    $region22: #{squarenet_forward.1} parent=1 // pred_check
      _
    $region23: #{squarenet_forward.1} parent=1 // pred_check_branch
      %45 = sbr.rel (0) target = $region25
    $region24: #{squarenet_forward.1} parent=1 // pred_region
      %47 = dma.done [#allocation4], 16
    $region25: #{squarenet_forward.1} parent=1 // pred_fallthru
      _
    // Predicated region
    $region26: #{squarenet_forward.1} parent=1 // pred_check
      _
    $region27: #{squarenet_forward.1} parent=1 // pred_check_branch
      %49 = sbr.rel (0) target = $region29
    $region28: #{squarenet_forward.1} parent=1 // pred_region
      %51 = dma.done [#allocation6], 16
    $region29: #{squarenet_forward.1} parent=1 // pred_fallthru
      _
    // Predicated region
    $region30: #{squarenet_forward.1} parent=1 // pred_check
      _
    $region31: #{squarenet_forward.1} parent=1 // pred_check_branch
      %53 = sbr.rel (0) target = $region33
    $region32: #{squarenet_forward.1} parent=1 // pred_region
      %55 = dma.done [#allocation6], 16
    $region33: #{squarenet_forward.1} parent=1 // pred_fallthru
      _
    %56 = sfence
    %v57 = vld [vmem:[%s4] sm:$0xff]
    %s58 = sld [smem:[#allocation2]]
    %v59 = vstv %s58
    %v60 = vadd.f32 %v59, 0.0
    %s61 = sld [smem:[#allocation3]]
    %v62 = vstv %s61
    %v63 = vmul.f32 %v62, %v57
    %s64 = sld [smem:[#allocation5]]
    %v65 = vstv %s64
    %v66 = vadd.f32 %v63, %v65
    %v67 = vmax.f32 %v66, 0.0
    %s68 = sld [smem:[#allocation7]]
    %v69 = vstv %s68
    %v70 = vmul.f32 %v67, %v69
    %v71 = vadd.f32 %v60, %v70
    %s72 = sld [smem:[#allocation3 + $0x1]]
    %v73 = vstv %s72
    %v74 = vmul.f32 %v73, %v57
    %s75 = sld [smem:[#allocation5 + $0x1]]
    %v76 = vstv %s75
    %v77 = vadd.f32 %v74, %v76
    %v78 = vmax.f32 %v77, 0.0
    %s79 = sld [smem:[#allocation7 + $0x1]]
    %v80 = vstv %s79
    %v81 = vmul.f32 %v78, %v80
    %v82 = vadd.f32 %v71, %v81
    %s83 = sld [smem:[#allocation3 + $0x2]]
    %v84 = vstv %s83
    %v85 = vmul.f32 %v84, %v57
    %s86 = sld [smem:[#allocation5 + $0x2]]
    %v87 = vstv %s86
    %v88 = vadd.f32 %v85, %v87
    %v89 = vmax.f32 %v88, 0.0
    %s90 = sld [smem:[#allocation7 + $0x2]]
    %v91 = vstv %s90
    %v92 = vmul.f32 %v89, %v91
    %v93 = vadd.f32 %v82, %v92
    %s94 = sld [smem:[#allocation3 + $0x3]]
    %v95 = vstv %s94
    %v96 = vmul.f32 %v95, %v57
    %s97 = sld [smem:[#allocation5 + $0x3]]
    %v98 = vstv %s97
    %v99 = vadd.f32 %v96, %v98
    %v100 = vmax.f32 %v99, 0.0
    %s101 = sld [smem:[#allocation7 + $0x3]]
    %v102 = vstv %s101
    %v103 = vmul.f32 %v100, %v102
    %v104 = vadd.f32 %v93, %v103
    %s105 = sld [smem:[#allocation3 + $0x4]]
    %v106 = vstv %s105
    %v107 = vmul.f32 %v106, %v57
    %s108 = sld [smem:[#allocation5 + $0x4]]
    %v109 = vstv %s108
    %v110 = vadd.f32 %v107, %v109
    %v111 = vmax.f32 %v110, 0.0
    %s112 = sld [smem:[#allocation7 + $0x4]]
    %v113 = vstv %s112
    %v114 = vmul.f32 %v111, %v113
    %v115 = vadd.f32 %v104, %v114
    %s116 = sld [smem:[#allocation3 + $0x5]]
    %v117 = vstv %s116
    %v118 = vmul.f32 %v117, %v57
    %s119 = sld [smem:[#allocation5 + $0x5]]
    %v120 = vstv %s119
    %v121 = vadd.f32 %v118, %v120
    %v122 = vmax.f32 %v121, 0.0
    %s123 = sld [smem:[#allocation7 + $0x5]]
    %v124 = vstv %s123
    %v125 = vmul.f32 %v122, %v124
    %v126 = vadd.f32 %v115, %v125
    %s127 = sld [smem:[#allocation3 + $0x6]]
    %v128 = vstv %s127
    %v129 = vmul.f32 %v128, %v57
    %s130 = sld [smem:[#allocation5 + $0x6]]
    %v131 = vstv %s130
    %v132 = vadd.f32 %v129, %v131
    %v133 = vmax.f32 %v132, 0.0
    %s134 = sld [smem:[#allocation7 + $0x6]]
    %v135 = vstv %s134
    %v136 = vmul.f32 %v133, %v135
    %v137 = vadd.f32 %v126, %v136
    %s138 = sld [smem:[#allocation3 + $0x7]]
    %v139 = vstv %s138
    %v140 = vmul.f32 %v139, %v57
    %s141 = sld [smem:[#allocation5 + $0x7]]
    %v142 = vstv %s141
    %v143 = vadd.f32 %v140, %v142
    %v144 = vmax.f32 %v143, 0.0
    %s145 = sld [smem:[#allocation7 + $0x7]]
    %v146 = vstv %s145
    %v147 = vmul.f32 %v144, %v146
    %v148 = vadd.f32 %v137, %v147
    %s149 = sld [smem:[#allocation3 + $0x8]]
    %v150 = vstv %s149
    %v151 = vmul.f32 %v150, %v57
    %s152 = sld [smem:[#allocation5 + $0x8]]
    %v153 = vstv %s152
    %v154 = vadd.f32 %v151, %v153
    %v155 = vmax.f32 %v154, 0.0
    %s156 = sld [smem:[#allocation7 + $0x8]]
    %v157 = vstv %s156
    %v158 = vmul.f32 %v155, %v157
    %v159 = vadd.f32 %v148, %v158
    %s160 = sld [smem:[#allocation3 + $0x9]]
    %v161 = vstv %s160
    %v162 = vmul.f32 %v161, %v57
    %s163 = sld [smem:[#allocation5 + $0x9]]
    %v164 = vstv %s163
    %v165 = vadd.f32 %v162, %v164
    %v166 = vmax.f32 %v165, 0.0
    %s167 = sld [smem:[#allocation7 + $0x9]]
    %v168 = vstv %s167
    %v169 = vmul.f32 %v166, %v168
    %v170 = vadd.f32 %v159, %v169
    %s171 = sld [smem:[#allocation3 + $0xa]]
    %v172 = vstv %s171
    %v173 = vmul.f32 %v172, %v57
    %s174 = sld [smem:[#allocation5 + $0xa]]
    %v175 = vstv %s174
    %v176 = vadd.f32 %v173, %v175
    %v177 = vmax.f32 %v176, 0.0
    %s178 = sld [smem:[#allocation7 + $0xa]]
    %v179 = vstv %s178
    %v180 = vmul.f32 %v177, %v179
    %v181 = vadd.f32 %v170, %v180
    %s182 = sld [smem:[#allocation3 + $0xb]]
    %v183 = vstv %s182
    %v184 = vmul.f32 %v183, %v57
    %s185 = sld [smem:[#allocation5 + $0xb]]
    %v186 = vstv %s185
    %v187 = vadd.f32 %v184, %v186
    %v188 = vmax.f32 %v187, 0.0
    %s189 = sld [smem:[#allocation7 + $0xb]]
    %v190 = vstv %s189
    %v191 = vmul.f32 %v188, %v190
    %v192 = vadd.f32 %v181, %v191
    %s193 = sld [smem:[#allocation3 + $0xc]]
    %v194 = vstv %s193
    %v195 = vmul.f32 %v194, %v57
    %s196 = sld [smem:[#allocation5 + $0xc]]
    %v197 = vstv %s196
    %v198 = vadd.f32 %v195, %v197
    %v199 = vmax.f32 %v198, 0.0
    %s200 = sld [smem:[#allocation7 + $0xc]]
    %v201 = vstv %s200
    %v202 = vmul.f32 %v199, %v201
    %v203 = vadd.f32 %v192, %v202
    %s204 = sld [smem:[#allocation3 + $0xd]]
    %v205 = vstv %s204
    %v206 = vmul.f32 %v205, %v57
    %s207 = sld [smem:[#allocation5 + $0xd]]
    %v208 = vstv %s207
    %v209 = vadd.f32 %v206, %v208
    %v210 = vmax.f32 %v209, 0.0
    %s211 = sld [smem:[#allocation7 + $0xd]]
    %v212 = vstv %s211
    %v213 = vmul.f32 %v210, %v212
    %v214 = vadd.f32 %v203, %v213
    %s215 = sld [smem:[#allocation3 + $0xe]]
    %v216 = vstv %s215
    %v217 = vmul.f32 %v216, %v57
    %s218 = sld [smem:[#allocation5 + $0xe]]
    %v219 = vstv %s218
    %v220 = vadd.f32 %v217, %v219
    %v221 = vmax.f32 %v220, 0.0
    %s222 = sld [smem:[#allocation7 + $0xe]]
    %v223 = vstv %s222
    %v224 = vmul.f32 %v221, %v223
    %v225 = vadd.f32 %v214, %v224
    %s226 = sld [smem:[#allocation3 + $0xf]]
    %v227 = vstv %s226
    %v228 = vmul.f32 %v227, %v57
    %s229 = sld [smem:[#allocation5 + $0xf]]
    %v230 = vstv %s229
    %v231 = vadd.f32 %v228, %v230
    %v232 = vmax.f32 %v231, 0.0
    %s233 = sld [smem:[#allocation7 + $0xf]]
    %v234 = vstv %s233
    %v235 = vmul.f32 %v232, %v234
    %v236 = vadd.f32 %v225, %v235
    %s237 = sld [smem:[#allocation3 + $0x10]]
    %v238 = vstv %s237
    %v239 = vmul.f32 %v238, %v57
    %s240 = sld [smem:[#allocation5 + $0x10]]
    %v241 = vstv %s240
    %v242 = vadd.f32 %v239, %v241
    %v243 = vmax.f32 %v242, 0.0
    %s244 = sld [smem:[#allocation7 + $0x10]]
    %v245 = vstv %s244
    %v246 = vmul.f32 %v243, %v245
    %v247 = vadd.f32 %v236, %v246
    %s248 = sld [smem:[#allocation3 + $0x11]]
    %v249 = vstv %s248
    %v250 = vmul.f32 %v249, %v57
    %s251 = sld [smem:[#allocation5 + $0x11]]
    %v252 = vstv %s251
    %v253 = vadd.f32 %v250, %v252
    %v254 = vmax.f32 %v253, 0.0
    %s255 = sld [smem:[#allocation7 + $0x11]]
    %v256 = vstv %s255
    %v257 = vmul.f32 %v254, %v256
    %v258 = vadd.f32 %v247, %v257
    %s259 = sld [smem:[#allocation3 + $0x12]]
    %v260 = vstv %s259
    %v261 = vmul.f32 %v260, %v57
    %s262 = sld [smem:[#allocation5 + $0x12]]
    %v263 = vstv %s262
    %v264 = vadd.f32 %v261, %v263
    %v265 = vmax.f32 %v264, 0.0
    %s266 = sld [smem:[#allocation7 + $0x12]]
    %v267 = vstv %s266
    %v268 = vmul.f32 %v265, %v267
    %v269 = vadd.f32 %v258, %v268
    %s270 = sld [smem:[#allocation3 + $0x13]]
    %v271 = vstv %s270
    %v272 = vmul.f32 %v271, %v57
    %s273 = sld [smem:[#allocation5 + $0x13]]
    %v274 = vstv %s273
    %v275 = vadd.f32 %v272, %v274
    %v276 = vmax.f32 %v275, 0.0
    %s277 = sld [smem:[#allocation7 + $0x13]]
    %v278 = vstv %s277
    %v279 = vmul.f32 %v276, %v278
    %v280 = vadd.f32 %v269, %v279
    %s281 = sld [smem:[#allocation3 + $0x14]]
    %v282 = vstv %s281
    %v283 = vmul.f32 %v282, %v57
    %s284 = sld [smem:[#allocation5 + $0x14]]
    %v285 = vstv %s284
    %v286 = vadd.f32 %v283, %v285
    %v287 = vmax.f32 %v286, 0.0
    %s288 = sld [smem:[#allocation7 + $0x14]]
    %v289 = vstv %s288
    %v290 = vmul.f32 %v287, %v289
    %v291 = vadd.f32 %v280, %v290
    %s292 = sld [smem:[#allocation3 + $0x15]]
    %v293 = vstv %s292
    %v294 = vmul.f32 %v293, %v57
    %s295 = sld [smem:[#allocation5 + $0x15]]
    %v296 = vstv %s295
    %v297 = vadd.f32 %v294, %v296
    %v298 = vmax.f32 %v297, 0.0
    %s299 = sld [smem:[#allocation7 + $0x15]]
    %v300 = vstv %s299
    %v301 = vmul.f32 %v298, %v300
    %v302 = vadd.f32 %v291, %v301
    %s303 = sld [smem:[#allocation3 + $0x16]]
    %v304 = vstv %s303
    %v305 = vmul.f32 %v304, %v57
    %s306 = sld [smem:[#allocation5 + $0x16]]
    %v307 = vstv %s306
    %v308 = vadd.f32 %v305, %v307
    %v309 = vmax.f32 %v308, 0.0
    %s310 = sld [smem:[#allocation7 + $0x16]]
    %v311 = vstv %s310
    %v312 = vmul.f32 %v309, %v311
    %v313 = vadd.f32 %v302, %v312
    %s314 = sld [smem:[#allocation3 + $0x17]]
    %v315 = vstv %s314
    %v316 = vmul.f32 %v315, %v57
    %s317 = sld [smem:[#allocation5 + $0x17]]
    %v318 = vstv %s317
    %v319 = vadd.f32 %v316, %v318
    %v320 = vmax.f32 %v319, 0.0
    %s321 = sld [smem:[#allocation7 + $0x17]]
    %v322 = vstv %s321
    %v323 = vmul.f32 %v320, %v322
    %v324 = vadd.f32 %v313, %v323
    %s325 = sld [smem:[#allocation3 + $0x18]]
    %v326 = vstv %s325
    %v327 = vmul.f32 %v326, %v57
    %s328 = sld [smem:[#allocation5 + $0x18]]
    %v329 = vstv %s328
    %v330 = vadd.f32 %v327, %v329
    %v331 = vmax.f32 %v330, 0.0
    %s332 = sld [smem:[#allocation7 + $0x18]]
    %v333 = vstv %s332
    %v334 = vmul.f32 %v331, %v333
    %v335 = vadd.f32 %v324, %v334
    %s336 = sld [smem:[#allocation3 + $0x19]]
    %v337 = vstv %s336
    %v338 = vmul.f32 %v337, %v57
    %s339 = sld [smem:[#allocation5 + $0x19]]
    %v340 = vstv %s339
    %v341 = vadd.f32 %v338, %v340
    %v342 = vmax.f32 %v341, 0.0
    %s343 = sld [smem:[#allocation7 + $0x19]]
    %v344 = vstv %s343
    %v345 = vmul.f32 %v342, %v344
    %v346 = vadd.f32 %v335, %v345
    %s347 = sld [smem:[#allocation3 + $0x1a]]
    %v348 = vstv %s347
    %v349 = vmul.f32 %v348, %v57
    %s350 = sld [smem:[#allocation5 + $0x1a]]
    %v351 = vstv %s350
    %v352 = vadd.f32 %v349, %v351
    %v353 = vmax.f32 %v352, 0.0
    %s354 = sld [smem:[#allocation7 + $0x1a]]
    %v355 = vstv %s354
    %v356 = vmul.f32 %v353, %v355
    %v357 = vadd.f32 %v346, %v356
    %s358 = sld [smem:[#allocation3 + $0x1b]]
    %v359 = vstv %s358
    %v360 = vmul.f32 %v359, %v57
    %s361 = sld [smem:[#allocation5 + $0x1b]]
    %v362 = vstv %s361
    %v363 = vadd.f32 %v360, %v362
    %v364 = vmax.f32 %v363, 0.0
    %s365 = sld [smem:[#allocation7 + $0x1b]]
    %v366 = vstv %s365
    %v367 = vmul.f32 %v364, %v366
    %v368 = vadd.f32 %v357, %v367
    %s369 = sld [smem:[#allocation3 + $0x1c]]
    %v370 = vstv %s369
    %v371 = vmul.f32 %v370, %v57
    %s372 = sld [smem:[#allocation5 + $0x1c]]
    %v373 = vstv %s372
    %v374 = vadd.f32 %v371, %v373
    %v375 = vmax.f32 %v374, 0.0
    %s376 = sld [smem:[#allocation7 + $0x1c]]
    %v377 = vstv %s376
    %v378 = vmul.f32 %v375, %v377
    %v379 = vadd.f32 %v368, %v378
    %s380 = sld [smem:[#allocation3 + $0x1d]]
    %v381 = vstv %s380
    %v382 = vmul.f32 %v381, %v57
    %s383 = sld [smem:[#allocation5 + $0x1d]]
    %v384 = vstv %s383
    %v385 = vadd.f32 %v382, %v384
    %v386 = vmax.f32 %v385, 0.0
    %s387 = sld [smem:[#allocation7 + $0x1d]]
    %v388 = vstv %s387
    %v389 = vmul.f32 %v386, %v388
    %v390 = vadd.f32 %v379, %v389
    %s391 = sld [smem:[#allocation3 + $0x1e]]
    %v392 = vstv %s391
    %v393 = vmul.f32 %v392, %v57
    %s394 = sld [smem:[#allocation5 + $0x1e]]
    %v395 = vstv %s394
    %v396 = vadd.f32 %v393, %v395
    %v397 = vmax.f32 %v396, 0.0
    %s398 = sld [smem:[#allocation7 + $0x1e]]
    %v399 = vstv %s398
    %v400 = vmul.f32 %v397, %v399
    %v401 = vadd.f32 %v390, %v400
    %s402 = sld [smem:[#allocation3 + $0x1f]]
    %v403 = vstv %s402
    %v404 = vmul.f32 %v403, %v57
    %s405 = sld [smem:[#allocation5 + $0x1f]]
    %v406 = vstv %s405
    %v407 = vadd.f32 %v404, %v406
    %v408 = vmax.f32 %v407, 0.0
    %s409 = sld [smem:[#allocation7 + $0x1f]]
    %v410 = vstv %s409
    %v411 = vmul.f32 %v408, %v410
    %v412 = vadd.f32 %v401, %v411
    %s413 = sld [smem:[#allocation3 + $0x20]]
    %v414 = vstv %s413
    %v415 = vmul.f32 %v414, %v57
    %s416 = sld [smem:[#allocation5 + $0x20]]
    %v417 = vstv %s416
    %v418 = vadd.f32 %v415, %v417
    %v419 = vmax.f32 %v418, 0.0
    %s420 = sld [smem:[#allocation7 + $0x20]]
    %v421 = vstv %s420
    %v422 = vmul.f32 %v419, %v421
    %v423 = vadd.f32 %v412, %v422
    %s424 = sld [smem:[#allocation3 + $0x21]]
    %v425 = vstv %s424
    %v426 = vmul.f32 %v425, %v57
    %s427 = sld [smem:[#allocation5 + $0x21]]
    %v428 = vstv %s427
    %v429 = vadd.f32 %v426, %v428
    %v430 = vmax.f32 %v429, 0.0
    %s431 = sld [smem:[#allocation7 + $0x21]]
    %v432 = vstv %s431
    %v433 = vmul.f32 %v430, %v432
    %v434 = vadd.f32 %v423, %v433
    %s435 = sld [smem:[#allocation3 + $0x22]]
    %v436 = vstv %s435
    %v437 = vmul.f32 %v436, %v57
    %s438 = sld [smem:[#allocation5 + $0x22]]
    %v439 = vstv %s438
    %v440 = vadd.f32 %v437, %v439
    %v441 = vmax.f32 %v440, 0.0
    %s442 = sld [smem:[#allocation7 + $0x22]]
    %v443 = vstv %s442
    %v444 = vmul.f32 %v441, %v443
    %v445 = vadd.f32 %v434, %v444
    %s446 = sld [smem:[#allocation3 + $0x23]]
    %v447 = vstv %s446
    %v448 = vmul.f32 %v447, %v57
    %s449 = sld [smem:[#allocation5 + $0x23]]
    %v450 = vstv %s449
    %v451 = vadd.f32 %v448, %v450
    %v452 = vmax.f32 %v451, 0.0
    %s453 = sld [smem:[#allocation7 + $0x23]]
    %v454 = vstv %s453
    %v455 = vmul.f32 %v452, %v454
    %v456 = vadd.f32 %v445, %v455
    %s457 = sld [smem:[#allocation3 + $0x24]]
    %v458 = vstv %s457
    %v459 = vmul.f32 %v458, %v57
    %s460 = sld [smem:[#allocation5 + $0x24]]
    %v461 = vstv %s460
    %v462 = vadd.f32 %v459, %v461
    %v463 = vmax.f32 %v462, 0.0
    %s464 = sld [smem:[#allocation7 + $0x24]]
    %v465 = vstv %s464
    %v466 = vmul.f32 %v463, %v465
    %v467 = vadd.f32 %v456, %v466
    %s468 = sld [smem:[#allocation3 + $0x25]]
    %v469 = vstv %s468
    %v470 = vmul.f32 %v469, %v57
    %s471 = sld [smem:[#allocation5 + $0x25]]
    %v472 = vstv %s471
    %v473 = vadd.f32 %v470, %v472
    %v474 = vmax.f32 %v473, 0.0
    %s475 = sld [smem:[#allocation7 + $0x25]]
    %v476 = vstv %s475
    %v477 = vmul.f32 %v474, %v476
    %v478 = vadd.f32 %v467, %v477
    %s479 = sld [smem:[#allocation3 + $0x26]]
    %v480 = vstv %s479
    %v481 = vmul.f32 %v480, %v57
    %s482 = sld [smem:[#allocation5 + $0x26]]
    %v483 = vstv %s482
    %v484 = vadd.f32 %v481, %v483
    %v485 = vmax.f32 %v484, 0.0
    %s486 = sld [smem:[#allocation7 + $0x26]]
    %v487 = vstv %s486
    %v488 = vmul.f32 %v485, %v487
    %v489 = vadd.f32 %v478, %v488
    %s490 = sld [smem:[#allocation3 + $0x27]]
    %v491 = vstv %s490
    %v492 = vmul.f32 %v491, %v57
    %s493 = sld [smem:[#allocation5 + $0x27]]
    %v494 = vstv %s493
    %v495 = vadd.f32 %v492, %v494
    %v496 = vmax.f32 %v495, 0.0
    %s497 = sld [smem:[#allocation7 + $0x27]]
    %v498 = vstv %s497
    %v499 = vmul.f32 %v496, %v498
    %v500 = vadd.f32 %v489, %v499
    %s501 = sld [smem:[#allocation3 + $0x28]]
    %v502 = vstv %s501
    %v503 = vmul.f32 %v502, %v57
    %s504 = sld [smem:[#allocation5 + $0x28]]
    %v505 = vstv %s504
    %v506 = vadd.f32 %v503, %v505
    %v507 = vmax.f32 %v506, 0.0
    %s508 = sld [smem:[#allocation7 + $0x28]]
    %v509 = vstv %s508
    %v510 = vmul.f32 %v507, %v509
    %v511 = vadd.f32 %v500, %v510
    %s512 = sld [smem:[#allocation3 + $0x29]]
    %v513 = vstv %s512
    %v514 = vmul.f32 %v513, %v57
    %s515 = sld [smem:[#allocation5 + $0x29]]
    %v516 = vstv %s515
    %v517 = vadd.f32 %v514, %v516
    %v518 = vmax.f32 %v517, 0.0
    %s519 = sld [smem:[#allocation7 + $0x29]]
    %v520 = vstv %s519
    %v521 = vmul.f32 %v518, %v520
    %v522 = vadd.f32 %v511, %v521
    %s523 = sld [smem:[#allocation3 + $0x2a]]
    %v524 = vstv %s523
    %v525 = vmul.f32 %v524, %v57
    %s526 = sld [smem:[#allocation5 + $0x2a]]
    %v527 = vstv %s526
    %v528 = vadd.f32 %v525, %v527
    %v529 = vmax.f32 %v528, 0.0
    %s530 = sld [smem:[#allocation7 + $0x2a]]
    %v531 = vstv %s530
    %v532 = vmul.f32 %v529, %v531
    %v533 = vadd.f32 %v522, %v532
    %s534 = sld [smem:[#allocation3 + $0x2b]]
    %v535 = vstv %s534
    %v536 = vmul.f32 %v535, %v57
    %s537 = sld [smem:[#allocation5 + $0x2b]]
    %v538 = vstv %s537
    %v539 = vadd.f32 %v536, %v538
    %v540 = vmax.f32 %v539, 0.0
    %s541 = sld [smem:[#allocation7 + $0x2b]]
    %v542 = vstv %s541
    %v543 = vmul.f32 %v540, %v542
    %v544 = vadd.f32 %v533, %v543
    %s545 = sld [smem:[#allocation3 + $0x2c]]
    %v546 = vstv %s545
    %v547 = vmul.f32 %v546, %v57
    %s548 = sld [smem:[#allocation5 + $0x2c]]
    %v549 = vstv %s548
    %v550 = vadd.f32 %v547, %v549
    %v551 = vmax.f32 %v550, 0.0
    %s552 = sld [smem:[#allocation7 + $0x2c]]
    %v553 = vstv %s552
    %v554 = vmul.f32 %v551, %v553
    %v555 = vadd.f32 %v544, %v554
    %s556 = sld [smem:[#allocation3 + $0x2d]]
    %v557 = vstv %s556
    %v558 = vmul.f32 %v557, %v57
    %s559 = sld [smem:[#allocation5 + $0x2d]]
    %v560 = vstv %s559
    %v561 = vadd.f32 %v558, %v560
    %v562 = vmax.f32 %v561, 0.0
    %s563 = sld [smem:[#allocation7 + $0x2d]]
    %v564 = vstv %s563
    %v565 = vmul.f32 %v562, %v564
    %v566 = vadd.f32 %v555, %v565
    %s567 = sld [smem:[#allocation3 + $0x2e]]
    %v568 = vstv %s567
    %v569 = vmul.f32 %v568, %v57
    %s570 = sld [smem:[#allocation5 + $0x2e]]
    %v571 = vstv %s570
    %v572 = vadd.f32 %v569, %v571
    %v573 = vmax.f32 %v572, 0.0
    %s574 = sld [smem:[#allocation7 + $0x2e]]
    %v575 = vstv %s574
    %v576 = vmul.f32 %v573, %v575
    %v577 = vadd.f32 %v566, %v576
    %s578 = sld [smem:[#allocation3 + $0x2f]]
    %v579 = vstv %s578
    %v580 = vmul.f32 %v579, %v57
    %s581 = sld [smem:[#allocation5 + $0x2f]]
    %v582 = vstv %s581
    %v583 = vadd.f32 %v580, %v582
    %v584 = vmax.f32 %v583, 0.0
    %s585 = sld [smem:[#allocation7 + $0x2f]]
    %v586 = vstv %s585
    %v587 = vmul.f32 %v584, %v586
    %v588 = vadd.f32 %v577, %v587
    %s589 = sld [smem:[#allocation3 + $0x30]]
    %v590 = vstv %s589
    %v591 = vmul.f32 %v590, %v57
    %s592 = sld [smem:[#allocation5 + $0x30]]
    %v593 = vstv %s592
    %v594 = vadd.f32 %v591, %v593
    %v595 = vmax.f32 %v594, 0.0
    %s596 = sld [smem:[#allocation7 + $0x30]]
    %v597 = vstv %s596
    %v598 = vmul.f32 %v595, %v597
    %v599 = vadd.f32 %v588, %v598
    %s600 = sld [smem:[#allocation3 + $0x31]]
    %v601 = vstv %s600
    %v602 = vmul.f32 %v601, %v57
    %s603 = sld [smem:[#allocation5 + $0x31]]
    %v604 = vstv %s603
    %v605 = vadd.f32 %v602, %v604
    %v606 = vmax.f32 %v605, 0.0
    %s607 = sld [smem:[#allocation7 + $0x31]]
    %v608 = vstv %s607
    %v609 = vmul.f32 %v606, %v608
    %v610 = vadd.f32 %v599, %v609
    %s611 = sld [smem:[#allocation3 + $0x32]]
    %v612 = vstv %s611
    %v613 = vmul.f32 %v612, %v57
    %s614 = sld [smem:[#allocation5 + $0x32]]
    %v615 = vstv %s614
    %v616 = vadd.f32 %v613, %v615
    %v617 = vmax.f32 %v616, 0.0
    %s618 = sld [smem:[#allocation7 + $0x32]]
    %v619 = vstv %s618
    %v620 = vmul.f32 %v617, %v619
    %v621 = vadd.f32 %v610, %v620
    %s622 = sld [smem:[#allocation3 + $0x33]]
    %v623 = vstv %s622
    %v624 = vmul.f32 %v623, %v57
    %s625 = sld [smem:[#allocation5 + $0x33]]
    %v626 = vstv %s625
    %v627 = vadd.f32 %v624, %v626
    %v628 = vmax.f32 %v627, 0.0
    %s629 = sld [smem:[#allocation7 + $0x33]]
    %v630 = vstv %s629
    %v631 = vmul.f32 %v628, %v630
    %v632 = vadd.f32 %v621, %v631
    %s633 = sld [smem:[#allocation3 + $0x34]]
    %v634 = vstv %s633
    %v635 = vmul.f32 %v634, %v57
    %s636 = sld [smem:[#allocation5 + $0x34]]
    %v637 = vstv %s636
    %v638 = vadd.f32 %v635, %v637
    %v639 = vmax.f32 %v638, 0.0
    %s640 = sld [smem:[#allocation7 + $0x34]]
    %v641 = vstv %s640
    %v642 = vmul.f32 %v639, %v641
    %v643 = vadd.f32 %v632, %v642
    %s644 = sld [smem:[#allocation3 + $0x35]]
    %v645 = vstv %s644
    %v646 = vmul.f32 %v645, %v57
    %s647 = sld [smem:[#allocation5 + $0x35]]
    %v648 = vstv %s647
    %v649 = vadd.f32 %v646, %v648
    %v650 = vmax.f32 %v649, 0.0
    %s651 = sld [smem:[#allocation7 + $0x35]]
    %v652 = vstv %s651
    %v653 = vmul.f32 %v650, %v652
    %v654 = vadd.f32 %v643, %v653
    %s655 = sld [smem:[#allocation3 + $0x36]]
    %v656 = vstv %s655
    %v657 = vmul.f32 %v656, %v57
    %s658 = sld [smem:[#allocation5 + $0x36]]
    %v659 = vstv %s658
    %v660 = vadd.f32 %v657, %v659
    %v661 = vmax.f32 %v660, 0.0
    %s662 = sld [smem:[#allocation7 + $0x36]]
    %v663 = vstv %s662
    %v664 = vmul.f32 %v661, %v663
    %v665 = vadd.f32 %v654, %v664
    %s666 = sld [smem:[#allocation3 + $0x37]]
    %v667 = vstv %s666
    %v668 = vmul.f32 %v667, %v57
    %s669 = sld [smem:[#allocation5 + $0x37]]
    %v670 = vstv %s669
    %v671 = vadd.f32 %v668, %v670
    %v672 = vmax.f32 %v671, 0.0
    %s673 = sld [smem:[#allocation7 + $0x37]]
    %v674 = vstv %s673
    %v675 = vmul.f32 %v672, %v674
    %v676 = vadd.f32 %v665, %v675
    %s677 = sld [smem:[#allocation3 + $0x38]]
    %v678 = vstv %s677
    %v679 = vmul.f32 %v678, %v57
    %s680 = sld [smem:[#allocation5 + $0x38]]
    %v681 = vstv %s680
    %v682 = vadd.f32 %v679, %v681
    %v683 = vmax.f32 %v682, 0.0
    %s684 = sld [smem:[#allocation7 + $0x38]]
    %v685 = vstv %s684
    %v686 = vmul.f32 %v683, %v685
    %v687 = vadd.f32 %v676, %v686
    %s688 = sld [smem:[#allocation3 + $0x39]]
    %v689 = vstv %s688
    %v690 = vmul.f32 %v689, %v57
    %s691 = sld [smem:[#allocation5 + $0x39]]
    %v692 = vstv %s691
    %v693 = vadd.f32 %v690, %v692
    %v694 = vmax.f32 %v693, 0.0
    %s695 = sld [smem:[#allocation7 + $0x39]]
    %v696 = vstv %s695
    %v697 = vmul.f32 %v694, %v696
    %v698 = vadd.f32 %v687, %v697
    %s699 = sld [smem:[#allocation3 + $0x3a]]
    %v700 = vstv %s699
    %v701 = vmul.f32 %v700, %v57
    %s702 = sld [smem:[#allocation5 + $0x3a]]
    %v703 = vstv %s702
    %v704 = vadd.f32 %v701, %v703
    %v705 = vmax.f32 %v704, 0.0
    %s706 = sld [smem:[#allocation7 + $0x3a]]
    %v707 = vstv %s706
    %v708 = vmul.f32 %v705, %v707
    %v709 = vadd.f32 %v698, %v708
    %s710 = sld [smem:[#allocation3 + $0x3b]]
    %v711 = vstv %s710
    %v712 = vmul.f32 %v711, %v57
    %s713 = sld [smem:[#allocation5 + $0x3b]]
    %v714 = vstv %s713
    %v715 = vadd.f32 %v712, %v714
    %v716 = vmax.f32 %v715, 0.0
    %s717 = sld [smem:[#allocation7 + $0x3b]]
    %v718 = vstv %s717
    %v719 = vmul.f32 %v716, %v718
    %v720 = vadd.f32 %v709, %v719
    %s721 = sld [smem:[#allocation3 + $0x3c]]
    %v722 = vstv %s721
    %v723 = vmul.f32 %v722, %v57
    %s724 = sld [smem:[#allocation5 + $0x3c]]
    %v725 = vstv %s724
    %v726 = vadd.f32 %v723, %v725
    %v727 = vmax.f32 %v726, 0.0
    %s728 = sld [smem:[#allocation7 + $0x3c]]
    %v729 = vstv %s728
    %v730 = vmul.f32 %v727, %v729
    %v731 = vadd.f32 %v720, %v730
    %s732 = sld [smem:[#allocation3 + $0x3d]]
    %v733 = vstv %s732
    %v734 = vmul.f32 %v733, %v57
    %s735 = sld [smem:[#allocation5 + $0x3d]]
    %v736 = vstv %s735
    %v737 = vadd.f32 %v734, %v736
    %v738 = vmax.f32 %v737, 0.0
    %s739 = sld [smem:[#allocation7 + $0x3d]]
    %v740 = vstv %s739
    %v741 = vmul.f32 %v738, %v740
    %v742 = vadd.f32 %v731, %v741
    %s743 = sld [smem:[#allocation3 + $0x3e]]
    %v744 = vstv %s743
    %v745 = vmul.f32 %v744, %v57
    %s746 = sld [smem:[#allocation5 + $0x3e]]
    %v747 = vstv %s746
    %v748 = vadd.f32 %v745, %v747
    %v749 = vmax.f32 %v748, 0.0
    %s750 = sld [smem:[#allocation7 + $0x3e]]
    %v751 = vstv %s750
    %v752 = vmul.f32 %v749, %v751
    %v753 = vadd.f32 %v742, %v752
    %s754 = sld [smem:[#allocation3 + $0x3f]]
    %v755 = vstv %s754
    %v756 = vmul.f32 %v755, %v57
    %s757 = sld [smem:[#allocation5 + $0x3f]]
    %v758 = vstv %s757
    %v759 = vadd.f32 %v756, %v758
    %v760 = vmax.f32 %v759, 0.0
    %s761 = sld [smem:[#allocation7 + $0x3f]]
    %v762 = vstv %s761
    %v763 = vmul.f32 %v760, %v762
    %v764 = vadd.f32 %v753, %v763
    %s765 = sld [smem:[#allocation3 + $0x40]]
    %v766 = vstv %s765
    %v767 = vmul.f32 %v766, %v57
    %s768 = sld [smem:[#allocation5 + $0x40]]
    %v769 = vstv %s768
    %v770 = vadd.f32 %v767, %v769
    %v771 = vmax.f32 %v770, 0.0
    %s772 = sld [smem:[#allocation7 + $0x40]]
    %v773 = vstv %s772
    %v774 = vmul.f32 %v771, %v773
    %v775 = vadd.f32 %v764, %v774
    %s776 = sld [smem:[#allocation3 + $0x41]]
    %v777 = vstv %s776
    %v778 = vmul.f32 %v777, %v57
    %s779 = sld [smem:[#allocation5 + $0x41]]
    %v780 = vstv %s779
    %v781 = vadd.f32 %v778, %v780
    %v782 = vmax.f32 %v781, 0.0
    %s783 = sld [smem:[#allocation7 + $0x41]]
    %v784 = vstv %s783
    %v785 = vmul.f32 %v782, %v784
    %v786 = vadd.f32 %v775, %v785
    %s787 = sld [smem:[#allocation3 + $0x42]]
    %v788 = vstv %s787
    %v789 = vmul.f32 %v788, %v57
    %s790 = sld [smem:[#allocation5 + $0x42]]
    %v791 = vstv %s790
    %v792 = vadd.f32 %v789, %v791
    %v793 = vmax.f32 %v792, 0.0
    %s794 = sld [smem:[#allocation7 + $0x42]]
    %v795 = vstv %s794
    %v796 = vmul.f32 %v793, %v795
    %v797 = vadd.f32 %v786, %v796
    %s798 = sld [smem:[#allocation3 + $0x43]]
    %v799 = vstv %s798
    %v800 = vmul.f32 %v799, %v57
    %s801 = sld [smem:[#allocation5 + $0x43]]
    %v802 = vstv %s801
    %v803 = vadd.f32 %v800, %v802
    %v804 = vmax.f32 %v803, 0.0
    %s805 = sld [smem:[#allocation7 + $0x43]]
    %v806 = vstv %s805
    %v807 = vmul.f32 %v804, %v806
    %v808 = vadd.f32 %v797, %v807
    %s809 = sld [smem:[#allocation3 + $0x44]]
    %v810 = vstv %s809
    %v811 = vmul.f32 %v810, %v57
    %s812 = sld [smem:[#allocation5 + $0x44]]
    %v813 = vstv %s812
    %v814 = vadd.f32 %v811, %v813
    %v815 = vmax.f32 %v814, 0.0
    %s816 = sld [smem:[#allocation7 + $0x44]]
    %v817 = vstv %s816
    %v818 = vmul.f32 %v815, %v817
    %v819 = vadd.f32 %v808, %v818
    %s820 = sld [smem:[#allocation3 + $0x45]]
    %v821 = vstv %s820
    %v822 = vmul.f32 %v821, %v57
    %s823 = sld [smem:[#allocation5 + $0x45]]
    %v824 = vstv %s823
    %v825 = vadd.f32 %v822, %v824
    %v826 = vmax.f32 %v825, 0.0
    %s827 = sld [smem:[#allocation7 + $0x45]]
    %v828 = vstv %s827
    %v829 = vmul.f32 %v826, %v828
    %v830 = vadd.f32 %v819, %v829
    %s831 = sld [smem:[#allocation3 + $0x46]]
    %v832 = vstv %s831
    %v833 = vmul.f32 %v832, %v57
    %s834 = sld [smem:[#allocation5 + $0x46]]
    %v835 = vstv %s834
    %v836 = vadd.f32 %v833, %v835
    %v837 = vmax.f32 %v836, 0.0
    %s838 = sld [smem:[#allocation7 + $0x46]]
    %v839 = vstv %s838
    %v840 = vmul.f32 %v837, %v839
    %v841 = vadd.f32 %v830, %v840
    %s842 = sld [smem:[#allocation3 + $0x47]]
    %v843 = vstv %s842
    %v844 = vmul.f32 %v843, %v57
    %s845 = sld [smem:[#allocation5 + $0x47]]
    %v846 = vstv %s845
    %v847 = vadd.f32 %v844, %v846
    %v848 = vmax.f32 %v847, 0.0
    %s849 = sld [smem:[#allocation7 + $0x47]]
    %v850 = vstv %s849
    %v851 = vmul.f32 %v848, %v850
    %v852 = vadd.f32 %v841, %v851
    %s853 = sld [smem:[#allocation3 + $0x48]]
    %v854 = vstv %s853
    %v855 = vmul.f32 %v854, %v57
    %s856 = sld [smem:[#allocation5 + $0x48]]
    %v857 = vstv %s856
    %v858 = vadd.f32 %v855, %v857
    %v859 = vmax.f32 %v858, 0.0
    %s860 = sld [smem:[#allocation7 + $0x48]]
    %v861 = vstv %s860
    %v862 = vmul.f32 %v859, %v861
    %v863 = vadd.f32 %v852, %v862
    %s864 = sld [smem:[#allocation3 + $0x49]]
    %v865 = vstv %s864
    %v866 = vmul.f32 %v865, %v57
    %s867 = sld [smem:[#allocation5 + $0x49]]
    %v868 = vstv %s867
    %v869 = vadd.f32 %v866, %v868
    %v870 = vmax.f32 %v869, 0.0
    %s871 = sld [smem:[#allocation7 + $0x49]]
    %v872 = vstv %s871
    %v873 = vmul.f32 %v870, %v872
    %v874 = vadd.f32 %v863, %v873
    %s875 = sld [smem:[#allocation3 + $0x4a]]
    %v876 = vstv %s875
    %v877 = vmul.f32 %v876, %v57
    %s878 = sld [smem:[#allocation5 + $0x4a]]
    %v879 = vstv %s878
    %v880 = vadd.f32 %v877, %v879
    %v881 = vmax.f32 %v880, 0.0
    %s882 = sld [smem:[#allocation7 + $0x4a]]
    %v883 = vstv %s882
    %v884 = vmul.f32 %v881, %v883
    %v885 = vadd.f32 %v874, %v884
    %s886 = sld [smem:[#allocation3 + $0x4b]]
    %v887 = vstv %s886
    %v888 = vmul.f32 %v887, %v57
    %s889 = sld [smem:[#allocation5 + $0x4b]]
    %v890 = vstv %s889
    %v891 = vadd.f32 %v888, %v890
    %v892 = vmax.f32 %v891, 0.0
    %s893 = sld [smem:[#allocation7 + $0x4b]]
    %v894 = vstv %s893
    %v895 = vmul.f32 %v892, %v894
    %v896 = vadd.f32 %v885, %v895
    %s897 = sld [smem:[#allocation3 + $0x4c]]
    %v898 = vstv %s897
    %v899 = vmul.f32 %v898, %v57
    %s900 = sld [smem:[#allocation5 + $0x4c]]
    %v901 = vstv %s900
    %v902 = vadd.f32 %v899, %v901
    %v903 = vmax.f32 %v902, 0.0
    %s904 = sld [smem:[#allocation7 + $0x4c]]
    %v905 = vstv %s904
    %v906 = vmul.f32 %v903, %v905
    %v907 = vadd.f32 %v896, %v906
    %s908 = sld [smem:[#allocation3 + $0x4d]]
    %v909 = vstv %s908
    %v910 = vmul.f32 %v909, %v57
    %s911 = sld [smem:[#allocation5 + $0x4d]]
    %v912 = vstv %s911
    %v913 = vadd.f32 %v910, %v912
    %v914 = vmax.f32 %v913, 0.0
    %s915 = sld [smem:[#allocation7 + $0x4d]]
    %v916 = vstv %s915
    %v917 = vmul.f32 %v914, %v916
    %v918 = vadd.f32 %v907, %v917
    %s919 = sld [smem:[#allocation3 + $0x4e]]
    %v920 = vstv %s919
    %v921 = vmul.f32 %v920, %v57
    %s922 = sld [smem:[#allocation5 + $0x4e]]
    %v923 = vstv %s922
    %v924 = vadd.f32 %v921, %v923
    %v925 = vmax.f32 %v924, 0.0
    %s926 = sld [smem:[#allocation7 + $0x4e]]
    %v927 = vstv %s926
    %v928 = vmul.f32 %v925, %v927
    %v929 = vadd.f32 %v918, %v928
    %s930 = sld [smem:[#allocation3 + $0x4f]]
    %v931 = vstv %s930
    %v932 = vmul.f32 %v931, %v57
    %s933 = sld [smem:[#allocation5 + $0x4f]]
    %v934 = vstv %s933
    %v935 = vadd.f32 %v932, %v934
    %v936 = vmax.f32 %v935, 0.0
    %s937 = sld [smem:[#allocation7 + $0x4f]]
    %v938 = vstv %s937
    %v939 = vmul.f32 %v936, %v938
    %v940 = vadd.f32 %v929, %v939
    %s941 = sld [smem:[#allocation3 + $0x50]]
    %v942 = vstv %s941
    %v943 = vmul.f32 %v942, %v57
    %s944 = sld [smem:[#allocation5 + $0x50]]
    %v945 = vstv %s944
    %v946 = vadd.f32 %v943, %v945
    %v947 = vmax.f32 %v946, 0.0
    %s948 = sld [smem:[#allocation7 + $0x50]]
    %v949 = vstv %s948
    %v950 = vmul.f32 %v947, %v949
    %v951 = vadd.f32 %v940, %v950
    %s952 = sld [smem:[#allocation3 + $0x51]]
    %v953 = vstv %s952
    %v954 = vmul.f32 %v953, %v57
    %s955 = sld [smem:[#allocation5 + $0x51]]
    %v956 = vstv %s955
    %v957 = vadd.f32 %v954, %v956
    %v958 = vmax.f32 %v957, 0.0
    %s959 = sld [smem:[#allocation7 + $0x51]]
    %v960 = vstv %s959
    %v961 = vmul.f32 %v958, %v960
    %v962 = vadd.f32 %v951, %v961
    %s963 = sld [smem:[#allocation3 + $0x52]]
    %v964 = vstv %s963
    %v965 = vmul.f32 %v964, %v57
    %s966 = sld [smem:[#allocation5 + $0x52]]
    %v967 = vstv %s966
    %v968 = vadd.f32 %v965, %v967
    %v969 = vmax.f32 %v968, 0.0
    %s970 = sld [smem:[#allocation7 + $0x52]]
    %v971 = vstv %s970
    %v972 = vmul.f32 %v969, %v971
    %v973 = vadd.f32 %v962, %v972
    %s974 = sld [smem:[#allocation3 + $0x53]]
    %v975 = vstv %s974
    %v976 = vmul.f32 %v975, %v57
    %s977 = sld [smem:[#allocation5 + $0x53]]
    %v978 = vstv %s977
    %v979 = vadd.f32 %v976, %v978
    %v980 = vmax.f32 %v979, 0.0
    %s981 = sld [smem:[#allocation7 + $0x53]]
    %v982 = vstv %s981
    %v983 = vmul.f32 %v980, %v982
    %v984 = vadd.f32 %v973, %v983
    %s985 = sld [smem:[#allocation3 + $0x54]]
    %v986 = vstv %s985
    %v987 = vmul.f32 %v986, %v57
    %s988 = sld [smem:[#allocation5 + $0x54]]
    %v989 = vstv %s988
    %v990 = vadd.f32 %v987, %v989
    %v991 = vmax.f32 %v990, 0.0
    %s992 = sld [smem:[#allocation7 + $0x54]]
    %v993 = vstv %s992
    %v994 = vmul.f32 %v991, %v993
    %v995 = vadd.f32 %v984, %v994
    %s996 = sld [smem:[#allocation3 + $0x55]]
    %v997 = vstv %s996
    %v998 = vmul.f32 %v997, %v57
    %s999 = sld [smem:[#allocation5 + $0x55]]
    %v1000 = vstv %s999
    %v1001 = vadd.f32 %v998, %v1000
    %v1002 = vmax.f32 %v1001, 0.0
    %s1003 = sld [smem:[#allocation7 + $0x55]]
    %v1004 = vstv %s1003
    %v1005 = vmul.f32 %v1002, %v1004
    %v1006 = vadd.f32 %v995, %v1005
    %s1007 = sld [smem:[#allocation3 + $0x56]]
    %v1008 = vstv %s1007
    %v1009 = vmul.f32 %v1008, %v57
    %s1010 = sld [smem:[#allocation5 + $0x56]]
    %v1011 = vstv %s1010
    %v1012 = vadd.f32 %v1009, %v1011
    %v1013 = vmax.f32 %v1012, 0.0
    %s1014 = sld [smem:[#allocation7 + $0x56]]
    %v1015 = vstv %s1014
    %v1016 = vmul.f32 %v1013, %v1015
    %v1017 = vadd.f32 %v1006, %v1016
    %s1018 = sld [smem:[#allocation3 + $0x57]]
    %v1019 = vstv %s1018
    %v1020 = vmul.f32 %v1019, %v57
    %s1021 = sld [smem:[#allocation5 + $0x57]]
    %v1022 = vstv %s1021
    %v1023 = vadd.f32 %v1020, %v1022
    %v1024 = vmax.f32 %v1023, 0.0
    %s1025 = sld [smem:[#allocation7 + $0x57]]
    %v1026 = vstv %s1025
    %v1027 = vmul.f32 %v1024, %v1026
    %v1028 = vadd.f32 %v1017, %v1027
    %s1029 = sld [smem:[#allocation3 + $0x58]]
    %v1030 = vstv %s1029
    %v1031 = vmul.f32 %v1030, %v57
    %s1032 = sld [smem:[#allocation5 + $0x58]]
    %v1033 = vstv %s1032
    %v1034 = vadd.f32 %v1031, %v1033
    %v1035 = vmax.f32 %v1034, 0.0
    %s1036 = sld [smem:[#allocation7 + $0x58]]
    %v1037 = vstv %s1036
    %v1038 = vmul.f32 %v1035, %v1037
    %v1039 = vadd.f32 %v1028, %v1038
    %s1040 = sld [smem:[#allocation3 + $0x59]]
    %v1041 = vstv %s1040
    %v1042 = vmul.f32 %v1041, %v57
    %s1043 = sld [smem:[#allocation5 + $0x59]]
    %v1044 = vstv %s1043
    %v1045 = vadd.f32 %v1042, %v1044
    %v1046 = vmax.f32 %v1045, 0.0
    %s1047 = sld [smem:[#allocation7 + $0x59]]
    %v1048 = vstv %s1047
    %v1049 = vmul.f32 %v1046, %v1048
    %v1050 = vadd.f32 %v1039, %v1049
    %s1051 = sld [smem:[#allocation3 + $0x5a]]
    %v1052 = vstv %s1051
    %v1053 = vmul.f32 %v1052, %v57
    %s1054 = sld [smem:[#allocation5 + $0x5a]]
    %v1055 = vstv %s1054
    %v1056 = vadd.f32 %v1053, %v1055
    %v1057 = vmax.f32 %v1056, 0.0
    %s1058 = sld [smem:[#allocation7 + $0x5a]]
    %v1059 = vstv %s1058
    %v1060 = vmul.f32 %v1057, %v1059
    %v1061 = vadd.f32 %v1050, %v1060
    %s1062 = sld [smem:[#allocation3 + $0x5b]]
    %v1063 = vstv %s1062
    %v1064 = vmul.f32 %v1063, %v57
    %s1065 = sld [smem:[#allocation5 + $0x5b]]
    %v1066 = vstv %s1065
    %v1067 = vadd.f32 %v1064, %v1066
    %v1068 = vmax.f32 %v1067, 0.0
    %s1069 = sld [smem:[#allocation7 + $0x5b]]
    %v1070 = vstv %s1069
    %v1071 = vmul.f32 %v1068, %v1070
    %v1072 = vadd.f32 %v1061, %v1071
    %s1073 = sld [smem:[#allocation3 + $0x5c]]
    %v1074 = vstv %s1073
    %v1075 = vmul.f32 %v1074, %v57
    %s1076 = sld [smem:[#allocation5 + $0x5c]]
    %v1077 = vstv %s1076
    %v1078 = vadd.f32 %v1075, %v1077
    %v1079 = vmax.f32 %v1078, 0.0
    %s1080 = sld [smem:[#allocation7 + $0x5c]]
    %v1081 = vstv %s1080
    %v1082 = vmul.f32 %v1079, %v1081
    %v1083 = vadd.f32 %v1072, %v1082
    %s1084 = sld [smem:[#allocation3 + $0x5d]]
    %v1085 = vstv %s1084
    %v1086 = vmul.f32 %v1085, %v57
    %s1087 = sld [smem:[#allocation5 + $0x5d]]
    %v1088 = vstv %s1087
    %v1089 = vadd.f32 %v1086, %v1088
    %v1090 = vmax.f32 %v1089, 0.0
    %s1091 = sld [smem:[#allocation7 + $0x5d]]
    %v1092 = vstv %s1091
    %v1093 = vmul.f32 %v1090, %v1092
    %v1094 = vadd.f32 %v1083, %v1093
    %s1095 = sld [smem:[#allocation3 + $0x5e]]
    %v1096 = vstv %s1095
    %v1097 = vmul.f32 %v1096, %v57
    %s1098 = sld [smem:[#allocation5 + $0x5e]]
    %v1099 = vstv %s1098
    %v1100 = vadd.f32 %v1097, %v1099
    %v1101 = vmax.f32 %v1100, 0.0
    %s1102 = sld [smem:[#allocation7 + $0x5e]]
    %v1103 = vstv %s1102
    %v1104 = vmul.f32 %v1101, %v1103
    %v1105 = vadd.f32 %v1094, %v1104
    %s1106 = sld [smem:[#allocation3 + $0x5f]]
    %v1107 = vstv %s1106
    %v1108 = vmul.f32 %v1107, %v57
    %s1109 = sld [smem:[#allocation5 + $0x5f]]
    %v1110 = vstv %s1109
    %v1111 = vadd.f32 %v1108, %v1110
    %v1112 = vmax.f32 %v1111, 0.0
    %s1113 = sld [smem:[#allocation7 + $0x5f]]
    %v1114 = vstv %s1113
    %v1115 = vmul.f32 %v1112, %v1114
    %v1116 = vadd.f32 %v1105, %v1115
    %s1117 = sld [smem:[#allocation3 + $0x60]]
    %v1118 = vstv %s1117
    %v1119 = vmul.f32 %v1118, %v57
    %s1120 = sld [smem:[#allocation5 + $0x60]]
    %v1121 = vstv %s1120
    %v1122 = vadd.f32 %v1119, %v1121
    %v1123 = vmax.f32 %v1122, 0.0
    %s1124 = sld [smem:[#allocation7 + $0x60]]
    %v1125 = vstv %s1124
    %v1126 = vmul.f32 %v1123, %v1125
    %v1127 = vadd.f32 %v1116, %v1126
    %s1128 = sld [smem:[#allocation3 + $0x61]]
    %v1129 = vstv %s1128
    %v1130 = vmul.f32 %v1129, %v57
    %s1131 = sld [smem:[#allocation5 + $0x61]]
    %v1132 = vstv %s1131
    %v1133 = vadd.f32 %v1130, %v1132
    %v1134 = vmax.f32 %v1133, 0.0
    %s1135 = sld [smem:[#allocation7 + $0x61]]
    %v1136 = vstv %s1135
    %v1137 = vmul.f32 %v1134, %v1136
    %v1138 = vadd.f32 %v1127, %v1137
    %s1139 = sld [smem:[#allocation3 + $0x62]]
    %v1140 = vstv %s1139
    %v1141 = vmul.f32 %v1140, %v57
    %s1142 = sld [smem:[#allocation5 + $0x62]]
    %v1143 = vstv %s1142
    %v1144 = vadd.f32 %v1141, %v1143
    %v1145 = vmax.f32 %v1144, 0.0
    %s1146 = sld [smem:[#allocation7 + $0x62]]
    %v1147 = vstv %s1146
    %v1148 = vmul.f32 %v1145, %v1147
    %v1149 = vadd.f32 %v1138, %v1148
    %s1150 = sld [smem:[#allocation3 + $0x63]]
    %v1151 = vstv %s1150
    %v1152 = vmul.f32 %v1151, %v57
    %s1153 = sld [smem:[#allocation5 + $0x63]]
    %v1154 = vstv %s1153
    %v1155 = vadd.f32 %v1152, %v1154
    %v1156 = vmax.f32 %v1155, 0.0
    %s1157 = sld [smem:[#allocation7 + $0x63]]
    %v1158 = vstv %s1157
    %v1159 = vmul.f32 %v1156, %v1158
    %v1160 = vadd.f32 %v1149, %v1159
    %1161 = vst [vmem:[%s5] sm:$0xff] %v1160
    // Predicated region
    $region34: #{squarenet_forward.1} parent=1 // pred_check
      _
    $region35: #{squarenet_forward.1} parent=1 // pred_check_branch
      %1163 = sbr.rel (0) target = $region37
    $region36: #{squarenet_forward.1} parent=1 // pred_region
      _
    $region37: #{squarenet_forward.1} parent=1 // pred_fallthru
      _
    // Predicated region
    $region38: #{squarenet_forward.1} parent=1 // pred_check
      _
    $region39: #{squarenet_forward.1} parent=1 // pred_check_branch
      %1165 = sbr.rel (0) target = $region41
    $region40: #{squarenet_forward.1} parent=1 // pred_region
      _
    $region41: #{squarenet_forward.1} parent=1 // pred_fallthru
      _
    %1166 = vsyncpa [#allocation4], 1
    %1167 = vsyncpa [#allocation6], 1

</llo_original>
